<compile_context>
chip_gen: v7x
topology: tpu7x:2x2x1
jax: 0.10.0
libtpu: 0.0.40
codegen_flags: <defaults>
</compile_context>

<pallas_src>
import numpy as np
import jax
import jax.numpy as jnp
from jax.experimental import pallas as pl
from jax.experimental.pallas import tpu as pltpu

# ----------------------- encoder tables (host-side glue) --------------------

_age_encoder = dict(unknown=-1.0, group_0_2=0.0, group_3_5=1.0, group_6_13=2.0,
                    group_14_18=3.0, group_19_33=4.0, group_34_48=5.0,
                    group_49_64=6.0, group_65_78=7.0, group_79_98=8.0)
_gender_encoder = dict(unknown=-1.0, female=0.0, male=1.0)
_result_encoder = {'unknown': -1.0, '0': 0.0, '1': 1.0, 0: 0.0, 1: 1.0, -1: -1.0}

# TODO(synk): pseudo-labeling path (PseudoLabeler / PseudoAgeGen) relies on
# pickled label files + per-uuid dict lookups; host-side glue with no Pallas
# equivalent, omitted.


# ----------------------------- Pallas kernel --------------------------------

def _label_encode_kernel(codes_ref, out_ref):
    """codes_ref: (3, TILE_R, L) packed as [age, gender, result] code planes.
    out_ref   : (3, TILE_R, L) packed as [result, gender, age] outputs."""
    # Single load of the packed tile; upcast to f32 for the compares/clips so
    # the body is valid on v5e (no bf16 VALU) as well as v6e/v7x.
    x = codes_ref[...].astype(jnp.float32)
    age, gen, res = x[0], x[1], x[2]

    # Age bucketing.  Encoder table only emits integer codes {-1, 0..8}, so
    #   (0<=age<=4 -> 0 ; age>=5 -> 1 ; age=-1 -> clip -> 0)
    # collapses exactly to a single threshold compare.
    age_o = (age >= 4.5).astype(jnp.float32)
    gen_o = jnp.clip(gen, 0.0, 1.0)
    res_o = jnp.clip(res, 0.0, 1.0)

    # Single packed, lane-dense store (keeps the one vst slot on v5e happy).
    out_ref[...] = jnp.stack([res_o, gen_o, age_o], axis=0).astype(out_ref.dtype)


def label_encode(codes, *, tile_rows=512):
    """Batched LabelEncoder.forward.

    codes: (3, R, L) float array (bf16 recommended), planes = [age, gender,
    result] raw encoder-table codes, one element per metadata record,
    flattened lane-dense (L a multiple of 128).

    Returns (result, gender, age), each (R, L), clipped to [0, 1], same dtype.
    """
    assert codes.ndim == 3 and codes.shape[0] == 3, codes.shape
    _, R, L = codes.shape
    assert L % 128 == 0, "lane dim must be a multiple of 128"
    dt = codes.dtype

    # Sub-32-bit dtypes pack along sublanes -> keep row tiles 16-aligned.
    row_align = 16 if jnp.dtype(dt).itemsize < 4 else 8
    if R < tile_rows:
        tile_rows = ((R + row_align - 1) // row_align) * row_align
    assert tile_rows % row_align == 0

    r_pad = pl.cdiv(R, tile_rows) * tile_rows
    if r_pad != R:
        codes = jnp.pad(codes, ((0, 0), (0, r_pad - R), (0, 0)))

    spec = pl.BlockSpec((3, tile_rows, L), lambda i: (0, i, 0))
    out = pl.pallas_call(
        _label_encode_kernel,
        out_shape=jax.ShapeDtypeStruct((3, r_pad, L), dt),
        grid=(r_pad // tile_rows,),
        in_specs=[spec],
        out_specs=spec,
        compiler_params=pltpu.CompilerParams(
            dimension_semantics=("parallel",)),   # lets v7x use both TCs
    )(codes)

    out = out[:, :R, :]
    # plane order of the output slab: (result, gender, age)
    return out[0], out[1], out[2]


# ------------------------------- reference ----------------------------------

def _reference(age_codes, gen_codes, res_codes):
    """Exact PyTorch forward() semantics, vectorized in numpy/float32."""
    age = np.asarray(age_codes, dtype=np.float32).copy()
    age = np.where((age >= 0.0) & (age <= 4.0), 0.0,
                   np.where(age >= 5.0, 1.0, age))
    res = np.clip(np.asarray(res_codes, dtype=np.float32), 0.0, 1.0)
    gen = np.clip(np.asarray(gen_codes, dtype=np.float32), 0.0, 1.0)
    age = np.clip(age, 0.0, 1.0)
    return res, gen, age


# --------------------------------- main --------------------------------------

if __name__ == "__main__":
    key = jax.random.PRNGKey(0)
    k1, k2, k3 = jax.random.split(key, 3)

    # R x L lane-dense slab of records (R rows x 128 lanes); 2 grid tiles.
    R, L = 1024, 128

    # Host glue: random *keys* into the encoder tables -> raw codes
    # (vectorized table lookup, exactly what forward()'s dict lookups do).
    age_vals = np.asarray(list(_age_encoder.values()), dtype=np.float32)
    gen_vals = np.asarray(list(_gender_encoder.values()), dtype=np.float32)
    res_vals = np.asarray([-1.0, 0.0, 1.0], dtype=np.float32)

    age_idx = np.asarray(jax.random.randint(k1, (R, L), 0, age_vals.size))
    gen_idx = np.asarray(jax.random.randint(k2, (R, L), 0, gen_vals.size))
    res_idx = np.asarray(jax.random.randint(k3, (R, L), 0, res_vals.size))

    age_codes = age_vals[age_idx]
    gen_codes = gen_vals[gen_idx]
    res_codes = res_vals[res_idx]

    # Pack once on the host; carry in bf16 (codes & outputs exactly
    # representable), no wrapper-side astype copies afterwards.
    codes = jnp.asarray(np.stack([age_codes, gen_codes, res_codes], axis=0),
                        dtype=jnp.bfloat16)

    result, gender, age = label_encode(codes)
    jax.block_until_ready((result, gender, age))

    ref_res, ref_gen, ref_age = _reference(age_codes, gen_codes, res_codes)
    np.testing.assert_array_equal(np.asarray(result, dtype=np.float32), ref_res)
    np.testing.assert_array_equal(np.asarray(gender, dtype=np.float32), ref_gen)
    np.testing.assert_array_equal(np.asarray(age, dtype=np.float32), ref_age)

    print("KERNEL_OK")
</pallas_src>

<mosaic_0001>
module attributes {stable_mosaic.version = 11 : i64} {
  func.func @_label_encode_kernel(%arg0: i32, %arg1: memref<3x512x128xbf16, #tpu.memory_space<vmem>>, %arg2: memref<3x512x128xbf16, #tpu.memory_space<vmem>>) attributes {dimension_semantics = [#tpu.dimension_semantics<parallel>], iteration_bounds = array<i64: 2>, scalar_prefetch = 0 : i64, scratch_operands = 0 : i64, tpu.core_type = #tpu.core_type<tc>, window_params = [{transform_indices = @transform_0, window_bounds = array<i64: 3, 512, 128>}, {transform_indices = @transform_1, window_bounds = array<i64: 3, 512, 128>}]} {
    %c0 = arith.constant 0 : index
    %c0_0 = arith.constant 0 : index
    %c0_1 = arith.constant 0 : index
    %0 = vector.load %arg1[%c0, %c0_0, %c0_1] : memref<3x512x128xbf16, #tpu.memory_space<vmem>>, vector<3x512x128xbf16>
    %1 = arith.extf %0 : vector<3x512x128xbf16> to vector<3x512x128xf32>
    %2 = vector.extract_strided_slice %1 {offsets = [0, 0, 0], sizes = [1, 512, 128], strides = [1, 1, 1]} : vector<3x512x128xf32> to vector<1x512x128xf32>
    %3 = vector.shape_cast %2 : vector<1x512x128xf32> to vector<512x128xf32>
    %4 = vector.extract_strided_slice %1 {offsets = [1, 0, 0], sizes = [1, 512, 128], strides = [1, 1, 1]} : vector<3x512x128xf32> to vector<1x512x128xf32>
    %5 = vector.shape_cast %4 : vector<1x512x128xf32> to vector<512x128xf32>
    %6 = vector.extract_strided_slice %1 {offsets = [2, 0, 0], sizes = [1, 512, 128], strides = [1, 1, 1]} : vector<3x512x128xf32> to vector<1x512x128xf32>
    %7 = vector.shape_cast %6 : vector<1x512x128xf32> to vector<512x128xf32>
    %cst = arith.constant 4.500000e+00 : f32
    %8 = vector.broadcast %cst : f32 to vector<512x128xf32>
    %9 = arith.cmpf oge, %3, %8 : vector<512x128xf32>
    %10 = arith.extui %9 : vector<512x128xi1> to vector<512x128xi32>
    %11 = arith.sitofp %10 : vector<512x128xi32> to vector<512x128xf32>
    %cst_2 = arith.constant 0.000000e+00 : f32
    %cst_3 = arith.constant 1.000000e+00 : f32
    %12 = vector.broadcast %cst_2 : f32 to vector<512x128xf32>
    %13 = arith.maximumf %12, %5 : vector<512x128xf32>
    %14 = vector.broadcast %cst_3 : f32 to vector<512x128xf32>
    %15 = arith.minimumf %14, %13 : vector<512x128xf32>
    %cst_4 = arith.constant 0.000000e+00 : f32
    %cst_5 = arith.constant 1.000000e+00 : f32
    %16 = vector.broadcast %cst_4 : f32 to vector<512x128xf32>
    %17 = arith.maximumf %16, %7 : vector<512x128xf32>
    %18 = vector.broadcast %cst_5 : f32 to vector<512x128xf32>
    %19 = arith.minimumf %18, %17 : vector<512x128xf32>
    %20 = vector.shape_cast %19 : vector<512x128xf32> to vector<1x512x128xf32>
    %21 = vector.shape_cast %15 : vector<512x128xf32> to vector<1x512x128xf32>
    %22 = vector.shape_cast %11 : vector<512x128xf32> to vector<1x512x128xf32>
    %23 = tpu.concatenate %20, %21, %22 in 0 : vector<1x512x128xf32>, vector<1x512x128xf32>, vector<1x512x128xf32> -> vector<3x512x128xf32>
    %24 = arith.truncf %23 : vector<3x512x128xf32> to vector<3x512x128xbf16>
    %c0_6 = arith.constant 0 : index
    %c0_7 = arith.constant 0 : index
    %c0_8 = arith.constant 0 : index
    %25 = vector.load %arg2[%c0_6, %c0_7, %c0_8] : memref<3x512x128xbf16, #tpu.memory_space<vmem>>, vector<3x512x128xbf16>
    tpu.vector_store %arg2[%c0_6, %c0_7, %c0_8], %24 {strides = array<i32>} : memref<3x512x128xbf16, #tpu.memory_space<vmem>>, vector<3x512x128xbf16>,
    return
  }
  func.func @transform_0(%arg0: i32) -> (i32, i32, i32) {
    %c0_i32 = arith.constant 0 : i32
    %c0_i32_0 = arith.constant 0 : i32
    %c0_i32_1 = arith.constant 0 : i32
    return %c0_i32, %arg0, %c0_i32_0 : i32, i32, i32
  }
  func.func @transform_1(%arg0: i32) -> (i32, i32, i32) {
    %c0_i32 = arith.constant 0 : i32
    %c0_i32_0 = arith.constant 0 : i32
    %c0_i32_1 = arith.constant 0 : i32
    return %c0_i32, %arg0, %c0_i32_0 : i32, i32, i32
  }
}

</mosaic_0001>

<llo_original>
// kernel: tpu_custom_call.1
$region0: #{tpu_custom_call.1}
  #allocation0 [shape = 'u32[]', space=smem, size = 0x4, offset = 0x4, fixed_abs, tag = 'smem constant byte address 0x4 - core index']
  #allocation1 [shape = 'u32[144,128]{1,0:T(1,128)}', space=vmem, size = 0x12000, scoped, tag = 'internal scratch']
  #allocation6 [shape = 's32[]', space=sflag, size = 0x4, offset = 0, fixed_abs, tag = 'sflag constant byte address 0x0 - dummy sync flag']
  #allocation8 [shape = 's32[]', space=sflag, size = 0x4, offset = 0, fixed_abs, tag = 'sflag constant byte address 0x0 - dummy sync flag']
  %s0 = inlined_call_operand.hbm [shape: bf16[3,1024,128], index: 0, kind: input, shape index: {}]
  %s1 = inlined_call_operand.hbm [shape: bf16[3,1024,128], index: 1, kind: output, shape index: {}]
  %s2 = sld [smem:[#allocation0]]
  $region41: #{tpu_custom_call.1} parent=0
    _
  %s4 = ssub.s32 1, %s2
  %s5 = scalar_select 0, %s4, %s2
  $region1: #{tpu_custom_call.1} parent=0
    #allocation2 [shape = 'u8[786432]{0}', space=vmem, size = 0xc0000, scoped, tag = 'input window, operand 0']
    #allocation3 [shape = 's32[2]{0}', space=sflag, size = 0x8, scoped, tag = 'scoped memory for tpu_custom_call.1']
    #allocation4 [shape = 's32[2]{0}', space=sflag, size = 0x8, scoped, tag = 'scoped memory for tpu_custom_call.1']
    #allocation5 [shape = 'u8[786432]{0}', space=vmem, size = 0xc0000, scoped, tag = 'output window, operand 0']
    %6 = vsyncpa [#allocation3], 0
    %s7 = scalar_lea.sflag [#allocation3], 1
    %8 = vsyncpa %s7, 0
    %9 = vsyncpa [#allocation4], 0
    %s10 = scalar_lea.sflag [#allocation4], 1
    %11 = vsyncpa %s10, 0
    loop: start=0, step=1, limit=4
    $region2: #{tpu_custom_call.1} parent=1 // loop_pre_header
      _
    $region3: #{tpu_custom_call.1} parent=1 // loop_header
      %s13 = sphi 0, %s17
      %p14 = scmp.ge.s32.totalorder %s13, 4
      %s23 = sphi 0, %s25
      %s26 = sphi 0, %s23
      %s27 = sphi 0, %s26
      %s43 = sphi 0, %s27
      %s49 = sphi 0, %s51
      %s52 = sphi 0, %s49
      %s53 = sphi 0, %s52
      %s69 = sphi 0, %s53
    $region4: #{tpu_custom_call.1} parent=1 // loop_header_branch
      %16 = sbr.rel (%p14) target = $region8
    $region5: #{tpu_custom_call.1} parent=1 // loop_body
      %s18 = ssub.s32 %s13, 1
      %s19 = ssub.s32 %s13, 2
      %s20 = sadd.s32 %s13, 1
      %s21 = ssub.s32 %s13, %s20
      %p22 = scmp.eq.s32.totalorder %s21, 0
      %s24 = sadd.s32 %s23, 1
      %s25 = scalar_select %p22, %s23, %s24
      %p28 = pneg %p22
      %p29 = scmp.eq.s32.totalorder %s13, 1
      %p30 = por %p28, %p29
      %p31 = scmp.ne.s32.totalorder %s23, %s26
      %p32 = scmp.eq.s32.totalorder %s13, 0
      %p33 = por %p31, %p32
      %p34 = scmp.ne.s32.totalorder %s23, %s26
      %p35 = scmp.eq.s32.totalorder %s18, 1
      %p36 = por %p34, %p35
      %p37 = scmp.ne.s32.totalorder %s26, %s27
      %p38 = scmp.eq.s32.totalorder %s18, 0
      %p39 = por %p37, %p38
      %p40 = scmp.ne.s32.totalorder %s26, %s27
      %p41 = scmp.eq.s32.totalorder %s19, 1
      %p42 = por %p40, %p41
      %p44 = scmp.ne.s32.totalorder %s27, %s43
      %p45 = scmp.eq.s32.totalorder %s19, 0
      %p46 = por %p44, %p45
      %s47 = ssub.s32 %s13, %s20
      %p48 = scmp.eq.s32.totalorder %s47, 0
      %s50 = sadd.s32 %s49, 1
      %s51 = scalar_select %p48, %s49, %s50
      %p54 = pneg %p48
      %p55 = scmp.eq.s32.totalorder %s13, 1
      %p56 = por %p54, %p55
      %p57 = scmp.ne.s32.totalorder %s49, %s52
      %p58 = scmp.eq.s32.totalorder %s13, 0
      %p59 = por %p57, %p58
      %p60 = scmp.ne.s32.totalorder %s49, %s52
      %p61 = scmp.eq.s32.totalorder %s18, 1
      %p62 = por %p60, %p61
      %p63 = scmp.ne.s32.totalorder %s52, %s53
      %p64 = scmp.eq.s32.totalorder %s18, 0
      %p65 = por %p63, %p64
      %p66 = scmp.ne.s32.totalorder %s52, %s53
      %p67 = scmp.eq.s32.totalorder %s19, 1
      %p68 = por %p66, %p67
      %p70 = scmp.ne.s32.totalorder %s53, %s69
      %p71 = scmp.eq.s32.totalorder %s19, 0
      %p72 = por %p70, %p71
      %p73 = scmp.le.s32.totalorder 1, %s13
      %p74 = scmp.lt.s32.totalorder %s13, 3
      %p75 = pnand %p73, %p74
      %p76 = pneg %p75
      // Predicated region
      $region9: #{tpu_custom_call.1} parent=5 // pred_check
        _
      $region10: #{tpu_custom_call.1} parent=5 // pred_check_branch
        %78 = sbr.rel (%p75) target = $region12
      $region11: #{tpu_custom_call.1} parent=5 // pred_region
        %s79 = ssub.s32 %s13, 1
      $region12: #{tpu_custom_call.1} parent=5 // pred_fallthru
        _
      %p80 = scmp.lt.s32.totalorder %s13, 2
      // Predicated region
      $region13: #{tpu_custom_call.1} parent=5 // pred_check
        %p81 = pneg %p80
      $region14: #{tpu_custom_call.1} parent=5 // pred_check_branch
        %83 = sbr.rel (%p81) target = $region16
      $region15: #{tpu_custom_call.1} parent=5 // pred_region
        // Predicated region
        $region17: #{tpu_custom_call.1} parent=15 // pred_check
          %p84 = pneg %p33
        $region18: #{tpu_custom_call.1} parent=15 // pred_check_branch
          %86 = sbr.rel (%p84) target = $region20
        $region19: #{tpu_custom_call.1} parent=15 // pred_region
          #allocation7 [shape = 'u32[6]{0}', space=smem, size = 0x18, scoped, tag = 'DMA stride descriptor']
          %s87 = sand.u32 %s23, 1
          %s88 = scalar_lea.sflag [#allocation3], %s87
          %s89 = sand.u32 %s23, 1
          %s90 = smul.addr %s89, 768
          %s91 = scalar_lea.vmem [#allocation2], %s90
          %s92 = smul.u32 64, %s13
          %s94 = ssub.s32 12288, 12288
          %95 = vsyncadd %s88, %s94
          %s96 = smul.addr %s92, 64
          %s97 = scalar_lea.hbm %s0, %s96
          %s99 = sshll.u32 1, 14
          %s100 = sxor.u32 4294967295, %s99
          %s102 = sld [smem:[#allocation0]]
          %s103 = sadd.s32 2, %s102
          %s105 = sshll.u32 7, 26
          %s106 = sxor.u32 4294967295, %s105
          %s107 = sand.u32 0, %s106
          %s108 = sshll.u32 %s103, 26
          %s109 = sor.u32 %s107, %s108
          %s110 = sshll.u32 %s91, 4
          %s111 = int_to_ptr.vmem [resolvable:$true] %s110
          %117 = sst [smem:[#allocation7]] 8192
          %s118 = scalar_lea.smem [#allocation7], 1
          %119 = sst [smem:[%s118]] 4096
          %s120 = scalar_lea.smem [#allocation7], 2
          %121 = sst [smem:[%s120]] 64
          %s122 = scalar_lea.smem [#allocation7], 3
          %123 = sst [smem:[%s122]] 64
          %s124 = scalar_lea.smem [#allocation7], 4
          %125 = sst [smem:[%s124]] 64
          %s126 = scalar_lea.smem [#allocation7], 5
          %127 = sst [smem:[%s126]] 4
          %129 = dma.general %s97, 12288, %s111, %s88, [#allocation6], [#allocation7], %s109, 0
        $region20: #{tpu_custom_call.1} parent=15 // pred_fallthru
          _
      $region16: #{tpu_custom_call.1} parent=5 // pred_fallthru
        _
      %p130 = scmp.le.s32.totalorder 1, %s13
      %p131 = scmp.lt.s32.totalorder %s13, 3
      %p132 = pnand %p130, %p131
      %p133 = pneg %p132
      // Predicated region
      $region21: #{tpu_custom_call.1} parent=5 // pred_check
        _
      $region22: #{tpu_custom_call.1} parent=5 // pred_check_branch
        %135 = sbr.rel (%p132) target = $region24
      $region23: #{tpu_custom_call.1} parent=5 // pred_region
        %s136 = ssub.s32 %s13, 1
        %s137 = sand.u32 %s26, 1
        %s138 = scalar_lea.sflag [#allocation3], %s137
        %s139 = sand.u32 %s26, 1
        %s140 = smul.addr %s139, 768
        %s141 = scalar_lea.vmem [#allocation2], %s140
        // Predicated region
        $region25: #{tpu_custom_call.1} parent=23 // pred_check
          %p142 = pneg %p39
        $region26: #{tpu_custom_call.1} parent=23 // pred_check_branch
          %144 = sbr.rel (%p142) target = $region28
        $region27: #{tpu_custom_call.1} parent=23 // pred_region
          %145 = dma.done %s138, 12288
        $region28: #{tpu_custom_call.1} parent=23 // pred_fallthru
          _
        %s146 = sand.u32 %s26, 1
        %s147 = scalar_lea.sflag [#allocation3], %s146
        %s148 = sand.u32 %s26, 1
        %s149 = smul.addr %s148, 768
        %s150 = scalar_lea.vmem [#allocation2], %s149
        %p151 = pneg %p39
        %p152 = pneg %p36
        %p153 = pneg %p65
        %p154 = pneg %p62
        %s155 = sand.u32 %s52, 1
        %s156 = scalar_lea.sflag [#allocation4], %s155
        %s157 = sand.u32 %s52, 1
        %s158 = smul.addr %s157, 768
        %s159 = scalar_lea.vmem [#allocation5], %s158
        %s160 = smul.u32 64, %s18
        %s161 = smul.u32 64, %s18
        %v162 = vld [vmem:[%s141] sm:$0xf]
        %v163 = vld [vmem:[%s141 + $0x4] sm:$0xf]
        %v164 = vld [vmem:[%s141 + $0x8] sm:$0xf]
        %v165 = vld [vmem:[%s141 + $0xc] sm:$0xf]
        %v166 = vld [vmem:[%s141 + $0x10] sm:$0xf]
        %v167 = vld [vmem:[%s141 + $0x14] sm:$0xf]
        %v168 = vld [vmem:[%s141 + $0x18] sm:$0xf]
        %v169 = vld [vmem:[%s141 + $0x1c] sm:$0xf]
        %v170 = vld [vmem:[%s141 + $0x20] sm:$0xf]
        %v171 = vld [vmem:[%s141 + $0x24] sm:$0xf]
        %v172 = vld [vmem:[%s141 + $0x28] sm:$0xf]
        %v173 = vld [vmem:[%s141 + $0x2c] sm:$0xf]
        %v174 = vld [vmem:[%s141 + $0x30] sm:$0xf]
        %v175 = vld [vmem:[%s141 + $0x34] sm:$0xf]
        %v176 = vld [vmem:[%s141 + $0x38] sm:$0xf]
        %v177 = vld [vmem:[%s141 + $0x3c] sm:$0xf]
        %v178 = vld [vmem:[%s141 + $0x40] sm:$0xf]
        %v179 = vld [vmem:[%s141 + $0x44] sm:$0xf]
        %v180 = vld [vmem:[%s141 + $0x48] sm:$0xf]
        %v181 = vld [vmem:[%s141 + $0x4c] sm:$0xf]
        %v182 = vld [vmem:[%s141 + $0x50] sm:$0xf]
        %v183 = vld [vmem:[%s141 + $0x54] sm:$0xf]
        %v184 = vld [vmem:[%s141 + $0x58] sm:$0xf]
        %v185 = vld [vmem:[%s141 + $0x5c] sm:$0xf]
        %v186 = vld [vmem:[%s141 + $0x60] sm:$0xf]
        %v187 = vld [vmem:[%s141 + $0x64] sm:$0xf]
        %v188 = vld [vmem:[%s141 + $0x68] sm:$0xf]
        %v189 = vld [vmem:[%s141 + $0x6c] sm:$0xf]
        %v190 = vld [vmem:[%s141 + $0x70] sm:$0xf]
        %v191 = vld [vmem:[%s141 + $0x74] sm:$0xf]
        %v192 = vld [vmem:[%s141 + $0x78] sm:$0xf]
        %v193 = vld [vmem:[%s141 + $0x7c] sm:$0xf]
        %v194 = vld [vmem:[%s141 + $0x80] sm:$0xf]
        %v195 = vld [vmem:[%s141 + $0x84] sm:$0xf]
        %v196 = vld [vmem:[%s141 + $0x88] sm:$0xf]
        %v197 = vld [vmem:[%s141 + $0x8c] sm:$0xf]
        %v198 = vld [vmem:[%s141 + $0x90] sm:$0xf]
        %v199 = vld [vmem:[%s141 + $0x94] sm:$0xf]
        %v200 = vld [vmem:[%s141 + $0x98] sm:$0xf]
        %v201 = vld [vmem:[%s141 + $0x9c] sm:$0xf]
        %v202 = vld [vmem:[%s141 + $0xa0] sm:$0xf]
        %v203 = vld [vmem:[%s141 + $0xa4] sm:$0xf]
        %v204 = vld [vmem:[%s141 + $0xa8] sm:$0xf]
        %v205 = vld [vmem:[%s141 + $0xac] sm:$0xf]
        %v206 = vld [vmem:[%s141 + $0xb0] sm:$0xf]
        %v207 = vld [vmem:[%s141 + $0xb4] sm:$0xf]
        %v208 = vld [vmem:[%s141 + $0xb8] sm:$0xf]
        %v209 = vld [vmem:[%s141 + $0xbc] sm:$0xf]
        %v210 = vld [vmem:[%s141 + $0xc0] sm:$0xf]
        %v211 = vld [vmem:[%s141 + $0xc4] sm:$0xf]
        %v212 = vld [vmem:[%s141 + $0xc8] sm:$0xf]
        %v213 = vld [vmem:[%s141 + $0xcc] sm:$0xf]
        %v214 = vld [vmem:[%s141 + $0xd0] sm:$0xf]
        %v215 = vld [vmem:[%s141 + $0xd4] sm:$0xf]
        %v216 = vld [vmem:[%s141 + $0xd8] sm:$0xf]
        %v217 = vld [vmem:[%s141 + $0xdc] sm:$0xf]
        %v218 = vld [vmem:[%s141 + $0xe0] sm:$0xf]
        %v219 = vld [vmem:[%s141 + $0xe4] sm:$0xf]
        %v220 = vld [vmem:[%s141 + $0xe8] sm:$0xf]
        %v221 = vld [vmem:[%s141 + $0xec] sm:$0xf]
        %v222 = vld [vmem:[%s141 + $0xf0] sm:$0xf]
        %v223 = vld [vmem:[%s141 + $0xf4] sm:$0xf]
        %v224 = vld [vmem:[%s141 + $0xf8] sm:$0xf]
        %v225 = vld [vmem:[%s141 + $0xfc] sm:$0xf]
        %v226 = vld [vmem:[%s141 + $0x100] sm:$0xf]
        %v227 = vld [vmem:[%s141 + $0x104] sm:$0xf]
        %v228 = vld [vmem:[%s141 + $0x108] sm:$0xf]
        %v229 = vld [vmem:[%s141 + $0x10c] sm:$0xf]
        %v230 = vld [vmem:[%s141 + $0x110] sm:$0xf]
        %v231 = vld [vmem:[%s141 + $0x114] sm:$0xf]
        %v232 = vld [vmem:[%s141 + $0x118] sm:$0xf]
        %v233 = vld [vmem:[%s141 + $0x11c] sm:$0xf]
        %v234 = vld [vmem:[%s141 + $0x120] sm:$0xf]
        %v235 = vld [vmem:[%s141 + $0x124] sm:$0xf]
        %v236 = vld [vmem:[%s141 + $0x128] sm:$0xf]
        %v237 = vld [vmem:[%s141 + $0x12c] sm:$0xf]
        %v238 = vld [vmem:[%s141 + $0x130] sm:$0xf]
        %v239 = vld [vmem:[%s141 + $0x134] sm:$0xf]
        %v240 = vld [vmem:[%s141 + $0x138] sm:$0xf]
        %v241 = vld [vmem:[%s141 + $0x13c] sm:$0xf]
        %v242 = vld [vmem:[%s141 + $0x140] sm:$0xf]
        %v243 = vld [vmem:[%s141 + $0x144] sm:$0xf]
        %v244 = vld [vmem:[%s141 + $0x148] sm:$0xf]
        %v245 = vld [vmem:[%s141 + $0x14c] sm:$0xf]
        %v246 = vld [vmem:[%s141 + $0x150] sm:$0xf]
        %v247 = vld [vmem:[%s141 + $0x154] sm:$0xf]
        %v248 = vld [vmem:[%s141 + $0x158] sm:$0xf]
        %v249 = vld [vmem:[%s141 + $0x15c] sm:$0xf]
        %v250 = vld [vmem:[%s141 + $0x160] sm:$0xf]
        %v251 = vld [vmem:[%s141 + $0x164] sm:$0xf]
        %v252 = vld [vmem:[%s141 + $0x168] sm:$0xf]
        %v253 = vld [vmem:[%s141 + $0x16c] sm:$0xf]
        %v254 = vld [vmem:[%s141 + $0x170] sm:$0xf]
        %v255 = vld [vmem:[%s141 + $0x174] sm:$0xf]
        %v256 = vld [vmem:[%s141 + $0x178] sm:$0xf]
        %v257 = vld [vmem:[%s141 + $0x17c] sm:$0xf]
        %v258 = vld [vmem:[%s141 + $0x180] sm:$0xf]
        %v259 = vld [vmem:[%s141 + $0x184] sm:$0xf]
        %v260 = vld [vmem:[%s141 + $0x188] sm:$0xf]
        %v261 = vld [vmem:[%s141 + $0x18c] sm:$0xf]
        %v262 = vld [vmem:[%s141 + $0x190] sm:$0xf]
        %v263 = vld [vmem:[%s141 + $0x194] sm:$0xf]
        %v264 = vld [vmem:[%s141 + $0x198] sm:$0xf]
        %v265 = vld [vmem:[%s141 + $0x19c] sm:$0xf]
        %v266 = vld [vmem:[%s141 + $0x1a0] sm:$0xf]
        %v267 = vld [vmem:[%s141 + $0x1a4] sm:$0xf]
        %v268 = vld [vmem:[%s141 + $0x1a8] sm:$0xf]
        %v269 = vld [vmem:[%s141 + $0x1ac] sm:$0xf]
        %v270 = vld [vmem:[%s141 + $0x1b0] sm:$0xf]
        %v271 = vld [vmem:[%s141 + $0x1b4] sm:$0xf]
        %v272 = vld [vmem:[%s141 + $0x1b8] sm:$0xf]
        %v273 = vld [vmem:[%s141 + $0x1bc] sm:$0xf]
        %v274 = vld [vmem:[%s141 + $0x1c0] sm:$0xf]
        %v275 = vld [vmem:[%s141 + $0x1c4] sm:$0xf]
        %v276 = vld [vmem:[%s141 + $0x1c8] sm:$0xf]
        %v277 = vld [vmem:[%s141 + $0x1cc] sm:$0xf]
        %v278 = vld [vmem:[%s141 + $0x1d0] sm:$0xf]
        %v279 = vld [vmem:[%s141 + $0x1d4] sm:$0xf]
        %v280 = vld [vmem:[%s141 + $0x1d8] sm:$0xf]
        %v281 = vld [vmem:[%s141 + $0x1dc] sm:$0xf]
        %v282 = vld [vmem:[%s141 + $0x1e0] sm:$0xf]
        %v283 = vld [vmem:[%s141 + $0x1e4] sm:$0xf]
        %v284 = vld [vmem:[%s141 + $0x1e8] sm:$0xf]
        %v285 = vld [vmem:[%s141 + $0x1ec] sm:$0xf]
        %v286 = vld [vmem:[%s141 + $0x1f0] sm:$0xf]
        %v287 = vld [vmem:[%s141 + $0x1f4] sm:$0xf]
        %v288 = vld [vmem:[%s141 + $0x1f8] sm:$0xf]
        %v289 = vld [vmem:[%s141 + $0x1fc] sm:$0xf]
        %v290 = vld [vmem:[%s141 + $0x200] sm:$0xf]
        %v291 = vld [vmem:[%s141 + $0x204] sm:$0xf]
        %v292 = vld [vmem:[%s141 + $0x208] sm:$0xf]
        %v293 = vld [vmem:[%s141 + $0x20c] sm:$0xf]
        %v294 = vld [vmem:[%s141 + $0x210] sm:$0xf]
        %v295 = vld [vmem:[%s141 + $0x214] sm:$0xf]
        %v296 = vld [vmem:[%s141 + $0x218] sm:$0xf]
        %v297 = vld [vmem:[%s141 + $0x21c] sm:$0xf]
        %v298 = vld [vmem:[%s141 + $0x220] sm:$0xf]
        %v299 = vld [vmem:[%s141 + $0x224] sm:$0xf]
        %v300 = vld [vmem:[%s141 + $0x228] sm:$0xf]
        %v301 = vld [vmem:[%s141 + $0x22c] sm:$0xf]
        %v302 = vld [vmem:[%s141 + $0x230] sm:$0xf]
        %v303 = vld [vmem:[%s141 + $0x234] sm:$0xf]
        %v304 = vld [vmem:[%s141 + $0x238] sm:$0xf]
        %v305 = vld [vmem:[%s141 + $0x23c] sm:$0xf]
        %v306 = vld [vmem:[%s141 + $0x240] sm:$0xf]
        %v307 = vld [vmem:[%s141 + $0x244] sm:$0xf]
        %v308 = vld [vmem:[%s141 + $0x248] sm:$0xf]
        %v309 = vld [vmem:[%s141 + $0x24c] sm:$0xf]
        %v310 = vld [vmem:[%s141 + $0x250] sm:$0xf]
        %v311 = vld [vmem:[%s141 + $0x254] sm:$0xf]
        %v312 = vld [vmem:[%s141 + $0x258] sm:$0xf]
        %v313 = vld [vmem:[%s141 + $0x25c] sm:$0xf]
        %v314 = vld [vmem:[%s141 + $0x260] sm:$0xf]
        %v315 = vld [vmem:[%s141 + $0x264] sm:$0xf]
        %v316 = vld [vmem:[%s141 + $0x268] sm:$0xf]
        %v317 = vld [vmem:[%s141 + $0x26c] sm:$0xf]
        %v318 = vld [vmem:[%s141 + $0x270] sm:$0xf]
        %v319 = vld [vmem:[%s141 + $0x274] sm:$0xf]
        %v320 = vld [vmem:[%s141 + $0x278] sm:$0xf]
        %v321 = vld [vmem:[%s141 + $0x27c] sm:$0xf]
        %v322 = vld [vmem:[%s141 + $0x280] sm:$0xf]
        %v323 = vld [vmem:[%s141 + $0x284] sm:$0xf]
        %v324 = vld [vmem:[%s141 + $0x288] sm:$0xf]
        %v325 = vld [vmem:[%s141 + $0x28c] sm:$0xf]
        %v326 = vld [vmem:[%s141 + $0x290] sm:$0xf]
        %v327 = vld [vmem:[%s141 + $0x294] sm:$0xf]
        %v328 = vld [vmem:[%s141 + $0x298] sm:$0xf]
        %v329 = vld [vmem:[%s141 + $0x29c] sm:$0xf]
        %v330 = vld [vmem:[%s141 + $0x2a0] sm:$0xf]
        %v331 = vld [vmem:[%s141 + $0x2a4] sm:$0xf]
        %v332 = vld [vmem:[%s141 + $0x2a8] sm:$0xf]
        %v333 = vld [vmem:[%s141 + $0x2ac] sm:$0xf]
        %v334 = vld [vmem:[%s141 + $0x2b0] sm:$0xf]
        %v335 = vld [vmem:[%s141 + $0x2b4] sm:$0xf]
        %v336 = vld [vmem:[%s141 + $0x2b8] sm:$0xf]
        %v337 = vld [vmem:[%s141 + $0x2bc] sm:$0xf]
        %v338 = vld [vmem:[%s141 + $0x2c0] sm:$0xf]
        %v339 = vld [vmem:[%s141 + $0x2c4] sm:$0xf]
        %v340 = vld [vmem:[%s141 + $0x2c8] sm:$0xf]
        %v341 = vld [vmem:[%s141 + $0x2cc] sm:$0xf]
        %v342 = vld [vmem:[%s141 + $0x2d0] sm:$0xf]
        %v343 = vld [vmem:[%s141 + $0x2d4] sm:$0xf]
        %v344 = vld [vmem:[%s141 + $0x2d8] sm:$0xf]
        %v345 = vld [vmem:[%s141 + $0x2dc] sm:$0xf]
        %v346 = vld [vmem:[%s141 + $0x2e0] sm:$0xf]
        %v347 = vld [vmem:[%s141 + $0x2e4] sm:$0xf]
        %v348 = vld [vmem:[%s141 + $0x2e8] sm:$0xf]
        %v349 = vld [vmem:[%s141 + $0x2ec] sm:$0xf]
        %v350 = vld [vmem:[%s141 + $0x2f0] sm:$0xf]
        %v351 = vld [vmem:[%s141 + $0x2f4] sm:$0xf]
        %v352 = vld [vmem:[%s141 + $0x2f8] sm:$0xf]
        %v353 = vld [vmem:[%s141 + $0x2fc] sm:$0xf]
        %v354 = vunpack.c.l.bf16 %v162
        %v355 = vunpack.c.l.bf16 %v163
        %v356 = vunpack.c.l.bf16 %v164
        %v357 = vunpack.c.l.bf16 %v165
        %v358 = vunpack.c.l.bf16 %v166
        %v359 = vunpack.c.l.bf16 %v167
        %v360 = vunpack.c.l.bf16 %v168
        %v361 = vunpack.c.l.bf16 %v169
        %v362 = vunpack.c.l.bf16 %v170
        %v363 = vunpack.c.l.bf16 %v171
        %v364 = vunpack.c.l.bf16 %v172
        %v365 = vunpack.c.l.bf16 %v173
        %v366 = vunpack.c.l.bf16 %v174
        %v367 = vunpack.c.l.bf16 %v175
        %v368 = vunpack.c.l.bf16 %v176
        %v369 = vunpack.c.l.bf16 %v177
        %v370 = vunpack.c.l.bf16 %v178
        %v371 = vunpack.c.l.bf16 %v179
        %v372 = vunpack.c.l.bf16 %v180
        %v373 = vunpack.c.l.bf16 %v181
        %v374 = vunpack.c.l.bf16 %v182
        %v375 = vunpack.c.l.bf16 %v183
        %v376 = vunpack.c.l.bf16 %v184
        %v377 = vunpack.c.l.bf16 %v185
        %v378 = vunpack.c.l.bf16 %v186
        %v379 = vunpack.c.l.bf16 %v187
        %v380 = vunpack.c.l.bf16 %v188
        %v381 = vunpack.c.l.bf16 %v189
        %v382 = vunpack.c.l.bf16 %v190
        %v383 = vunpack.c.l.bf16 %v191
        %v384 = vunpack.c.l.bf16 %v192
        %v385 = vunpack.c.l.bf16 %v193
        %v386 = vunpack.c.l.bf16 %v194
        %v387 = vunpack.c.l.bf16 %v195
        %v388 = vunpack.c.l.bf16 %v196
        %v389 = vunpack.c.l.bf16 %v197
        %v390 = vunpack.c.l.bf16 %v198
        %v391 = vunpack.c.l.bf16 %v199
        %v392 = vunpack.c.l.bf16 %v200
        %v393 = vunpack.c.l.bf16 %v201
        %v394 = vunpack.c.l.bf16 %v202
        %v395 = vunpack.c.l.bf16 %v203
        %v396 = vunpack.c.l.bf16 %v204
        %v397 = vunpack.c.l.bf16 %v205
        %v398 = vunpack.c.l.bf16 %v206
        %v399 = vunpack.c.l.bf16 %v207
        %v400 = vunpack.c.l.bf16 %v208
        %v401 = vunpack.c.l.bf16 %v209
        %v402 = vunpack.c.l.bf16 %v210
        %v403 = vunpack.c.l.bf16 %v211
        %v404 = vunpack.c.l.bf16 %v212
        %v405 = vunpack.c.l.bf16 %v213
        %v406 = vunpack.c.l.bf16 %v214
        %v407 = vunpack.c.l.bf16 %v215
        %v408 = vunpack.c.l.bf16 %v216
        %v409 = vunpack.c.l.bf16 %v217
        %v410 = vunpack.c.l.bf16 %v218
        %v411 = vunpack.c.l.bf16 %v219
        %v412 = vunpack.c.l.bf16 %v220
        %v413 = vunpack.c.l.bf16 %v221
        %v414 = vunpack.c.l.bf16 %v222
        %v415 = vunpack.c.l.bf16 %v223
        %v416 = vunpack.c.l.bf16 %v224
        %v417 = vunpack.c.l.bf16 %v225
        %v418 = vunpack.c.l.bf16 %v226
        %v419 = vunpack.c.l.bf16 %v227
        %v420 = vunpack.c.l.bf16 %v228
        %v421 = vunpack.c.l.bf16 %v229
        %v422 = vunpack.c.l.bf16 %v230
        %v423 = vunpack.c.l.bf16 %v231
        %v424 = vunpack.c.l.bf16 %v232
        %v425 = vunpack.c.l.bf16 %v233
        %v426 = vunpack.c.l.bf16 %v234
        %v427 = vunpack.c.l.bf16 %v235
        %v428 = vunpack.c.l.bf16 %v236
        %v429 = vunpack.c.l.bf16 %v237
        %v430 = vunpack.c.l.bf16 %v238
        %v431 = vunpack.c.l.bf16 %v239
        %v432 = vunpack.c.l.bf16 %v240
        %v433 = vunpack.c.l.bf16 %v241
        %v434 = vunpack.c.l.bf16 %v242
        %v435 = vunpack.c.l.bf16 %v243
        %v436 = vunpack.c.l.bf16 %v244
        %v437 = vunpack.c.l.bf16 %v245
        %v438 = vunpack.c.l.bf16 %v246
        %v439 = vunpack.c.l.bf16 %v247
        %v440 = vunpack.c.l.bf16 %v248
        %v441 = vunpack.c.l.bf16 %v249
        %v442 = vunpack.c.l.bf16 %v250
        %v443 = vunpack.c.l.bf16 %v251
        %v444 = vunpack.c.l.bf16 %v252
        %v445 = vunpack.c.l.bf16 %v253
        %v446 = vunpack.c.l.bf16 %v254
        %v447 = vunpack.c.l.bf16 %v255
        %v448 = vunpack.c.l.bf16 %v256
        %v449 = vunpack.c.l.bf16 %v257
        %v450 = vunpack.c.l.bf16 %v258
        %v451 = vunpack.c.l.bf16 %v259
        %v452 = vunpack.c.l.bf16 %v260
        %v453 = vunpack.c.l.bf16 %v261
        %v454 = vunpack.c.l.bf16 %v262
        %v455 = vunpack.c.l.bf16 %v263
        %v456 = vunpack.c.l.bf16 %v264
        %v457 = vunpack.c.l.bf16 %v265
        %v458 = vunpack.c.l.bf16 %v266
        %v459 = vunpack.c.l.bf16 %v267
        %v460 = vunpack.c.l.bf16 %v268
        %v461 = vunpack.c.l.bf16 %v269
        %v462 = vunpack.c.l.bf16 %v270
        %v463 = vunpack.c.l.bf16 %v271
        %v464 = vunpack.c.l.bf16 %v272
        %v465 = vunpack.c.l.bf16 %v273
        %v466 = vunpack.c.l.bf16 %v274
        %v467 = vunpack.c.l.bf16 %v275
        %v468 = vunpack.c.l.bf16 %v276
        %v469 = vunpack.c.l.bf16 %v277
        %v470 = vunpack.c.l.bf16 %v278
        %v471 = vunpack.c.l.bf16 %v279
        %v472 = vunpack.c.l.bf16 %v280
        %v473 = vunpack.c.l.bf16 %v281
        %v474 = vunpack.c.l.bf16 %v282
        %v475 = vunpack.c.l.bf16 %v283
        %v476 = vunpack.c.l.bf16 %v284
        %v477 = vunpack.c.l.bf16 %v285
        %v478 = vunpack.c.l.bf16 %v286
        %v479 = vunpack.c.l.bf16 %v287
        %v480 = vunpack.c.l.bf16 %v288
        %v481 = vunpack.c.l.bf16 %v289
        %v482 = vunpack.c.l.bf16 %v290
        %v483 = vunpack.c.l.bf16 %v291
        %v484 = vunpack.c.l.bf16 %v292
        %v485 = vunpack.c.l.bf16 %v293
        %v486 = vunpack.c.l.bf16 %v294
        %v487 = vunpack.c.l.bf16 %v295
        %v488 = vunpack.c.l.bf16 %v296
        %v489 = vunpack.c.l.bf16 %v297
        %v490 = vunpack.c.l.bf16 %v298
        %v491 = vunpack.c.l.bf16 %v299
        %v492 = vunpack.c.l.bf16 %v300
        %v493 = vunpack.c.l.bf16 %v301
        %v494 = vunpack.c.l.bf16 %v302
        %v495 = vunpack.c.l.bf16 %v303
        %v496 = vunpack.c.l.bf16 %v304
        %v497 = vunpack.c.l.bf16 %v305
        %v498 = vunpack.c.l.bf16 %v306
        %v499 = vunpack.c.l.bf16 %v307
        %v500 = vunpack.c.l.bf16 %v308
        %v501 = vunpack.c.l.bf16 %v309
        %v502 = vunpack.c.l.bf16 %v310
        %v503 = vunpack.c.l.bf16 %v311
        %v504 = vunpack.c.l.bf16 %v312
        %v505 = vunpack.c.l.bf16 %v313
        %v506 = vunpack.c.l.bf16 %v314
        %v507 = vunpack.c.l.bf16 %v315
        %v508 = vunpack.c.l.bf16 %v316
        %v509 = vunpack.c.l.bf16 %v317
        %v510 = vunpack.c.l.bf16 %v318
        %v511 = vunpack.c.l.bf16 %v319
        %v512 = vunpack.c.l.bf16 %v320
        %v513 = vunpack.c.l.bf16 %v321
        %v514 = vunpack.c.l.bf16 %v322
        %v515 = vunpack.c.l.bf16 %v323
        %v516 = vunpack.c.l.bf16 %v324
        %v517 = vunpack.c.l.bf16 %v325
        %v518 = vunpack.c.l.bf16 %v326
        %v519 = vunpack.c.l.bf16 %v327
        %v520 = vunpack.c.l.bf16 %v328
        %v521 = vunpack.c.l.bf16 %v329
        %v522 = vunpack.c.l.bf16 %v330
        %v523 = vunpack.c.l.bf16 %v331
        %v524 = vunpack.c.l.bf16 %v332
        %v525 = vunpack.c.l.bf16 %v333
        %v526 = vunpack.c.l.bf16 %v334
        %v527 = vunpack.c.l.bf16 %v335
        %v528 = vunpack.c.l.bf16 %v336
        %v529 = vunpack.c.l.bf16 %v337
        %v530 = vunpack.c.l.bf16 %v338
        %v531 = vunpack.c.l.bf16 %v339
        %v532 = vunpack.c.l.bf16 %v340
        %v533 = vunpack.c.l.bf16 %v341
        %v534 = vunpack.c.l.bf16 %v342
        %v535 = vunpack.c.l.bf16 %v343
        %v536 = vunpack.c.l.bf16 %v344
        %v537 = vunpack.c.l.bf16 %v345
        %v538 = vunpack.c.l.bf16 %v346
        %v539 = vunpack.c.l.bf16 %v347
        %v540 = vunpack.c.l.bf16 %v348
        %v541 = vunpack.c.l.bf16 %v349
        %v542 = vunpack.c.l.bf16 %v350
        %v543 = vunpack.c.l.bf16 %v351
        %v544 = vunpack.c.l.bf16 %v352
        %v545 = vunpack.c.l.bf16 %v353
        %vm546 = vcmp.ge.f32.partialorder %v354, 4.5
        %vm547 = vcmp.ge.f32.partialorder %v355, 4.5
        %vm548 = vcmp.ge.f32.partialorder %v356, 4.5
        %vm549 = vcmp.ge.f32.partialorder %v357, 4.5
        %vm550 = vcmp.ge.f32.partialorder %v358, 4.5
        %vm551 = vcmp.ge.f32.partialorder %v359, 4.5
        %vm552 = vcmp.ge.f32.partialorder %v360, 4.5
        %vm553 = vcmp.ge.f32.partialorder %v361, 4.5
        %vm554 = vcmp.ge.f32.partialorder %v362, 4.5
        %vm555 = vcmp.ge.f32.partialorder %v363, 4.5
        %vm556 = vcmp.ge.f32.partialorder %v364, 4.5
        %vm557 = vcmp.ge.f32.partialorder %v365, 4.5
        %vm558 = vcmp.ge.f32.partialorder %v366, 4.5
        %vm559 = vcmp.ge.f32.partialorder %v367, 4.5
        %vm560 = vcmp.ge.f32.partialorder %v368, 4.5
        %vm561 = vcmp.ge.f32.partialorder %v369, 4.5
        %vm562 = vcmp.ge.f32.partialorder %v370, 4.5
        %vm563 = vcmp.ge.f32.partialorder %v371, 4.5
        %vm564 = vcmp.ge.f32.partialorder %v372, 4.5
        %vm565 = vcmp.ge.f32.partialorder %v373, 4.5
        %vm566 = vcmp.ge.f32.partialorder %v374, 4.5
        %vm567 = vcmp.ge.f32.partialorder %v375, 4.5
        %vm568 = vcmp.ge.f32.partialorder %v376, 4.5
        %vm569 = vcmp.ge.f32.partialorder %v377, 4.5
        %vm570 = vcmp.ge.f32.partialorder %v378, 4.5
        %vm571 = vcmp.ge.f32.partialorder %v379, 4.5
        %vm572 = vcmp.ge.f32.partialorder %v380, 4.5
        %vm573 = vcmp.ge.f32.partialorder %v381, 4.5
        %vm574 = vcmp.ge.f32.partialorder %v382, 4.5
        %vm575 = vcmp.ge.f32.partialorder %v383, 4.5
        %vm576 = vcmp.ge.f32.partialorder %v384, 4.5
        %vm577 = vcmp.ge.f32.partialorder %v385, 4.5
        %vm578 = vcmp.ge.f32.partialorder %v386, 4.5
        %vm579 = vcmp.ge.f32.partialorder %v387, 4.5
        %vm580 = vcmp.ge.f32.partialorder %v388, 4.5
        %vm581 = vcmp.ge.f32.partialorder %v389, 4.5
        %vm582 = vcmp.ge.f32.partialorder %v390, 4.5
        %vm583 = vcmp.ge.f32.partialorder %v391, 4.5
        %vm584 = vcmp.ge.f32.partialorder %v392, 4.5
        %vm585 = vcmp.ge.f32.partialorder %v393, 4.5
        %vm586 = vcmp.ge.f32.partialorder %v394, 4.5
        %vm587 = vcmp.ge.f32.partialorder %v395, 4.5
        %vm588 = vcmp.ge.f32.partialorder %v396, 4.5
        %vm589 = vcmp.ge.f32.partialorder %v397, 4.5
        %vm590 = vcmp.ge.f32.partialorder %v398, 4.5
        %vm591 = vcmp.ge.f32.partialorder %v399, 4.5
        %vm592 = vcmp.ge.f32.partialorder %v400, 4.5
        %vm593 = vcmp.ge.f32.partialorder %v401, 4.5
        %vm594 = vcmp.ge.f32.partialorder %v402, 4.5
        %vm595 = vcmp.ge.f32.partialorder %v403, 4.5
        %vm596 = vcmp.ge.f32.partialorder %v404, 4.5
        %vm597 = vcmp.ge.f32.partialorder %v405, 4.5
        %vm598 = vcmp.ge.f32.partialorder %v406, 4.5
        %vm599 = vcmp.ge.f32.partialorder %v407, 4.5
        %vm600 = vcmp.ge.f32.partialorder %v408, 4.5
        %vm601 = vcmp.ge.f32.partialorder %v409, 4.5
        %vm602 = vcmp.ge.f32.partialorder %v410, 4.5
        %vm603 = vcmp.ge.f32.partialorder %v411, 4.5
        %vm604 = vcmp.ge.f32.partialorder %v412, 4.5
        %vm605 = vcmp.ge.f32.partialorder %v413, 4.5
        %vm606 = vcmp.ge.f32.partialorder %v414, 4.5
        %vm607 = vcmp.ge.f32.partialorder %v415, 4.5
        %vm608 = vcmp.ge.f32.partialorder %v416, 4.5
        %vm609 = vcmp.ge.f32.partialorder %v417, 4.5
        %v610 = vsel %vm546, 1, 0
        %v611 = vsel %vm547, 1, 0
        %v612 = vsel %vm548, 1, 0
        %v613 = vsel %vm549, 1, 0
        %v614 = vsel %vm550, 1, 0
        %v615 = vsel %vm551, 1, 0
        %v616 = vsel %vm552, 1, 0
        %v617 = vsel %vm553, 1, 0
        %v618 = vsel %vm554, 1, 0
        %v619 = vsel %vm555, 1, 0
        %v620 = vsel %vm556, 1, 0
        %v621 = vsel %vm557, 1, 0
        %v622 = vsel %vm558, 1, 0
        %v623 = vsel %vm559, 1, 0
        %v624 = vsel %vm560, 1, 0
        %v625 = vsel %vm561, 1, 0
        %v626 = vsel %vm562, 1, 0
        %v627 = vsel %vm563, 1, 0
        %v628 = vsel %vm564, 1, 0
        %v629 = vsel %vm565, 1, 0
        %v630 = vsel %vm566, 1, 0
        %v631 = vsel %vm567, 1, 0
        %v632 = vsel %vm568, 1, 0
        %v633 = vsel %vm569, 1, 0
        %v634 = vsel %vm570, 1, 0
        %v635 = vsel %vm571, 1, 0
        %v636 = vsel %vm572, 1, 0
        %v637 = vsel %vm573, 1, 0
        %v638 = vsel %vm574, 1, 0
        %v639 = vsel %vm575, 1, 0
        %v640 = vsel %vm576, 1, 0
        %v641 = vsel %vm577, 1, 0
        %v642 = vsel %vm578, 1, 0
        %v643 = vsel %vm579, 1, 0
        %v644 = vsel %vm580, 1, 0
        %v645 = vsel %vm581, 1, 0
        %v646 = vsel %vm582, 1, 0
        %v647 = vsel %vm583, 1, 0
        %v648 = vsel %vm584, 1, 0
        %v649 = vsel %vm585, 1, 0
        %v650 = vsel %vm586, 1, 0
        %v651 = vsel %vm587, 1, 0
        %v652 = vsel %vm588, 1, 0
        %v653 = vsel %vm589, 1, 0
        %v654 = vsel %vm590, 1, 0
        %v655 = vsel %vm591, 1, 0
        %v656 = vsel %vm592, 1, 0
        %v657 = vsel %vm593, 1, 0
        %v658 = vsel %vm594, 1, 0
        %v659 = vsel %vm595, 1, 0
        %v660 = vsel %vm596, 1, 0
        %v661 = vsel %vm597, 1, 0
        %v662 = vsel %vm598, 1, 0
        %v663 = vsel %vm599, 1, 0
        %v664 = vsel %vm600, 1, 0
        %v665 = vsel %vm601, 1, 0
        %v666 = vsel %vm602, 1, 0
        %v667 = vsel %vm603, 1, 0
        %v668 = vsel %vm604, 1, 0
        %v669 = vsel %vm605, 1, 0
        %v670 = vsel %vm606, 1, 0
        %v671 = vsel %vm607, 1, 0
        %v672 = vsel %vm608, 1, 0
        %v673 = vsel %vm609, 1, 0
        %v674 = vcvt.s32.f32 %v610
        %v675 = vcvt.s32.f32 %v611
        %v676 = vcvt.s32.f32 %v612
        %v677 = vcvt.s32.f32 %v613
        %v678 = vcvt.s32.f32 %v614
        %v679 = vcvt.s32.f32 %v615
        %v680 = vcvt.s32.f32 %v616
        %v681 = vcvt.s32.f32 %v617
        %v682 = vcvt.s32.f32 %v618
        %v683 = vcvt.s32.f32 %v619
        %v684 = vcvt.s32.f32 %v620
        %v685 = vcvt.s32.f32 %v621
        %v686 = vcvt.s32.f32 %v622
        %v687 = vcvt.s32.f32 %v623
        %v688 = vcvt.s32.f32 %v624
        %v689 = vcvt.s32.f32 %v625
        %v690 = vcvt.s32.f32 %v626
        %v691 = vcvt.s32.f32 %v627
        %v692 = vcvt.s32.f32 %v628
        %v693 = vcvt.s32.f32 %v629
        %v694 = vcvt.s32.f32 %v630
        %v695 = vcvt.s32.f32 %v631
        %v696 = vcvt.s32.f32 %v632
        %v697 = vcvt.s32.f32 %v633
        %v698 = vcvt.s32.f32 %v634
        %v699 = vcvt.s32.f32 %v635
        %v700 = vcvt.s32.f32 %v636
        %v701 = vcvt.s32.f32 %v637
        %v702 = vcvt.s32.f32 %v638
        %v703 = vcvt.s32.f32 %v639
        %v704 = vcvt.s32.f32 %v640
        %v705 = vcvt.s32.f32 %v641
        %v706 = vcvt.s32.f32 %v642
        %v707 = vcvt.s32.f32 %v643
        %v708 = vcvt.s32.f32 %v644
        %v709 = vcvt.s32.f32 %v645
        %v710 = vcvt.s32.f32 %v646
        %v711 = vcvt.s32.f32 %v647
        %v712 = vcvt.s32.f32 %v648
        %v713 = vcvt.s32.f32 %v649
        %v714 = vcvt.s32.f32 %v650
        %v715 = vcvt.s32.f32 %v651
        %v716 = vcvt.s32.f32 %v652
        %v717 = vcvt.s32.f32 %v653
        %v718 = vcvt.s32.f32 %v654
        %v719 = vcvt.s32.f32 %v655
        %v720 = vcvt.s32.f32 %v656
        %v721 = vcvt.s32.f32 %v657
        %v722 = vcvt.s32.f32 %v658
        %v723 = vcvt.s32.f32 %v659
        %v724 = vcvt.s32.f32 %v660
        %v725 = vcvt.s32.f32 %v661
        %v726 = vcvt.s32.f32 %v662
        %v727 = vcvt.s32.f32 %v663
        %v728 = vcvt.s32.f32 %v664
        %v729 = vcvt.s32.f32 %v665
        %v730 = vcvt.s32.f32 %v666
        %v731 = vcvt.s32.f32 %v667
        %v732 = vcvt.s32.f32 %v668
        %v733 = vcvt.s32.f32 %v669
        %v734 = vcvt.s32.f32 %v670
        %v735 = vcvt.s32.f32 %v671
        %v736 = vcvt.s32.f32 %v672
        %v737 = vcvt.s32.f32 %v673
        %v738 = vmax.f32 %v418, 0.0
        %v739 = vmax.f32 %v419, 0.0
        %v740 = vmax.f32 %v420, 0.0
        %v741 = vmax.f32 %v421, 0.0
        %v742 = vmax.f32 %v422, 0.0
        %v743 = vmax.f32 %v423, 0.0
        %v744 = vmax.f32 %v424, 0.0
        %v745 = vmax.f32 %v425, 0.0
        %v746 = vmax.f32 %v426, 0.0
        %v747 = vmax.f32 %v427, 0.0
        %v748 = vmax.f32 %v428, 0.0
        %v749 = vmax.f32 %v429, 0.0
        %v750 = vmax.f32 %v430, 0.0
        %v751 = vmax.f32 %v431, 0.0
        %v752 = vmax.f32 %v432, 0.0
        %v753 = vmax.f32 %v433, 0.0
        %v754 = vmax.f32 %v434, 0.0
        %v755 = vmax.f32 %v435, 0.0
        %v756 = vmax.f32 %v436, 0.0
        %v757 = vmax.f32 %v437, 0.0
        %v758 = vmax.f32 %v438, 0.0
        %v759 = vmax.f32 %v439, 0.0
        %v760 = vmax.f32 %v440, 0.0
        %v761 = vmax.f32 %v441, 0.0
        %v762 = vmax.f32 %v442, 0.0
        %v763 = vmax.f32 %v443, 0.0
        %v764 = vmax.f32 %v444, 0.0
        %v765 = vmax.f32 %v445, 0.0
        %v766 = vmax.f32 %v446, 0.0
        %v767 = vmax.f32 %v447, 0.0
        %v768 = vmax.f32 %v448, 0.0
        %v769 = vmax.f32 %v449, 0.0
        %v770 = vmax.f32 %v450, 0.0
        %v771 = vmax.f32 %v451, 0.0
        %v772 = vmax.f32 %v452, 0.0
        %v773 = vmax.f32 %v453, 0.0
        %v774 = vmax.f32 %v454, 0.0
        %v775 = vmax.f32 %v455, 0.0
        %v776 = vmax.f32 %v456, 0.0
        %v777 = vmax.f32 %v457, 0.0
        %v778 = vmax.f32 %v458, 0.0
        %v779 = vmax.f32 %v459, 0.0
        %v780 = vmax.f32 %v460, 0.0
        %v781 = vmax.f32 %v461, 0.0
        %v782 = vmax.f32 %v462, 0.0
        %v783 = vmax.f32 %v463, 0.0
        %v784 = vmax.f32 %v464, 0.0
        %v785 = vmax.f32 %v465, 0.0
        %v786 = vmax.f32 %v466, 0.0
        %v787 = vmax.f32 %v467, 0.0
        %v788 = vmax.f32 %v468, 0.0
        %v789 = vmax.f32 %v469, 0.0
        %v790 = vmax.f32 %v470, 0.0
        %v791 = vmax.f32 %v471, 0.0
        %v792 = vmax.f32 %v472, 0.0
        %v793 = vmax.f32 %v473, 0.0
        %v794 = vmax.f32 %v474, 0.0
        %v795 = vmax.f32 %v475, 0.0
        %v796 = vmax.f32 %v476, 0.0
        %v797 = vmax.f32 %v477, 0.0
        %v798 = vmax.f32 %v478, 0.0
        %v799 = vmax.f32 %v479, 0.0
        %v800 = vmax.f32 %v480, 0.0
        %v801 = vmax.f32 %v481, 0.0
        %v802 = vmin.f32 %v738, 1.0
        %v803 = vmin.f32 %v739, 1.0
        %v804 = vmin.f32 %v740, 1.0
        %v805 = vmin.f32 %v741, 1.0
        %v806 = vmin.f32 %v742, 1.0
        %v807 = vmin.f32 %v743, 1.0
        %v808 = vmin.f32 %v744, 1.0
        %v809 = vmin.f32 %v745, 1.0
        %v810 = vmin.f32 %v746, 1.0
        %v811 = vmin.f32 %v747, 1.0
        %v812 = vmin.f32 %v748, 1.0
        %v813 = vmin.f32 %v749, 1.0
        %v814 = vmin.f32 %v750, 1.0
        %v815 = vmin.f32 %v751, 1.0
        %v816 = vmin.f32 %v752, 1.0
        %v817 = vmin.f32 %v753, 1.0
        %v818 = vmin.f32 %v754, 1.0
        %v819 = vmin.f32 %v755, 1.0
        %v820 = vmin.f32 %v756, 1.0
        %v821 = vmin.f32 %v757, 1.0
        %v822 = vmin.f32 %v758, 1.0
        %v823 = vmin.f32 %v759, 1.0
        %v824 = vmin.f32 %v760, 1.0
        %v825 = vmin.f32 %v761, 1.0
        %v826 = vmin.f32 %v762, 1.0
        %v827 = vmin.f32 %v763, 1.0
        %v828 = vmin.f32 %v764, 1.0
        %v829 = vmin.f32 %v765, 1.0
        %v830 = vmin.f32 %v766, 1.0
        %v831 = vmin.f32 %v767, 1.0
        %v832 = vmin.f32 %v768, 1.0
        %v833 = vmin.f32 %v769, 1.0
        %v834 = vmin.f32 %v770, 1.0
        %v835 = vmin.f32 %v771, 1.0
        %v836 = vmin.f32 %v772, 1.0
        %v837 = vmin.f32 %v773, 1.0
        %v838 = vmin.f32 %v774, 1.0
        %v839 = vmin.f32 %v775, 1.0
        %v840 = vmin.f32 %v776, 1.0
        %v841 = vmin.f32 %v777, 1.0
        %v842 = vmin.f32 %v778, 1.0
        %v843 = vmin.f32 %v779, 1.0
        %v844 = vmin.f32 %v780, 1.0
        %v845 = vmin.f32 %v781, 1.0
        %v846 = vmin.f32 %v782, 1.0
        %v847 = vmin.f32 %v783, 1.0
        %v848 = vmin.f32 %v784, 1.0
        %v849 = vmin.f32 %v785, 1.0
        %v850 = vmin.f32 %v786, 1.0
        %v851 = vmin.f32 %v787, 1.0
        %v852 = vmin.f32 %v788, 1.0
        %v853 = vmin.f32 %v789, 1.0
        %v854 = vmin.f32 %v790, 1.0
        %v855 = vmin.f32 %v791, 1.0
        %v856 = vmin.f32 %v792, 1.0
        %v857 = vmin.f32 %v793, 1.0
        %v858 = vmin.f32 %v794, 1.0
        %v859 = vmin.f32 %v795, 1.0
        %v860 = vmin.f32 %v796, 1.0
        %v861 = vmin.f32 %v797, 1.0
        %v862 = vmin.f32 %v798, 1.0
        %v863 = vmin.f32 %v799, 1.0
        %v864 = vmin.f32 %v800, 1.0
        %v865 = vmin.f32 %v801, 1.0
        %v866 = vmax.f32 %v482, 0.0
        %v867 = vmax.f32 %v483, 0.0
        %v868 = vmax.f32 %v484, 0.0
        %v869 = vmax.f32 %v485, 0.0
        %v870 = vmax.f32 %v486, 0.0
        %v871 = vmax.f32 %v487, 0.0
        %v872 = vmax.f32 %v488, 0.0
        %v873 = vmax.f32 %v489, 0.0
        %v874 = vmax.f32 %v490, 0.0
        %v875 = vmax.f32 %v491, 0.0
        %v876 = vmax.f32 %v492, 0.0
        %v877 = vmax.f32 %v493, 0.0
        %v878 = vmax.f32 %v494, 0.0
        %v879 = vmax.f32 %v495, 0.0
        %v880 = vmax.f32 %v496, 0.0
        %v881 = vmax.f32 %v497, 0.0
        %v882 = vmax.f32 %v498, 0.0
        %v883 = vmax.f32 %v499, 0.0
        %v884 = vmax.f32 %v500, 0.0
        %v885 = vmax.f32 %v501, 0.0
        %v886 = vmax.f32 %v502, 0.0
        %v887 = vmax.f32 %v503, 0.0
        %v888 = vmax.f32 %v504, 0.0
        %v889 = vmax.f32 %v505, 0.0
        %v890 = vmax.f32 %v506, 0.0
        %v891 = vmax.f32 %v507, 0.0
        %v892 = vmax.f32 %v508, 0.0
        %v893 = vmax.f32 %v509, 0.0
        %v894 = vmax.f32 %v510, 0.0
        %v895 = vmax.f32 %v511, 0.0
        %v896 = vmax.f32 %v512, 0.0
        %v897 = vmax.f32 %v513, 0.0
        %v898 = vmax.f32 %v514, 0.0
        %v899 = vmax.f32 %v515, 0.0
        %v900 = vmax.f32 %v516, 0.0
        %v901 = vmax.f32 %v517, 0.0
        %v902 = vmax.f32 %v518, 0.0
        %v903 = vmax.f32 %v519, 0.0
        %v904 = vmax.f32 %v520, 0.0
        %v905 = vmax.f32 %v521, 0.0
        %v906 = vmax.f32 %v522, 0.0
        %v907 = vmax.f32 %v523, 0.0
        %v908 = vmax.f32 %v524, 0.0
        %v909 = vmax.f32 %v525, 0.0
        %v910 = vmax.f32 %v526, 0.0
        %v911 = vmax.f32 %v527, 0.0
        %v912 = vmax.f32 %v528, 0.0
        %v913 = vmax.f32 %v529, 0.0
        %v914 = vmax.f32 %v530, 0.0
        %v915 = vmax.f32 %v531, 0.0
        %v916 = vmax.f32 %v532, 0.0
        %v917 = vmax.f32 %v533, 0.0
        %v918 = vmax.f32 %v534, 0.0
        %v919 = vmax.f32 %v535, 0.0
        %v920 = vmax.f32 %v536, 0.0
        %v921 = vmax.f32 %v537, 0.0
        %v922 = vmax.f32 %v538, 0.0
        %v923 = vmax.f32 %v539, 0.0
        %v924 = vmax.f32 %v540, 0.0
        %v925 = vmax.f32 %v541, 0.0
        %v926 = vmax.f32 %v542, 0.0
        %v927 = vmax.f32 %v543, 0.0
        %v928 = vmax.f32 %v544, 0.0
        %v929 = vmax.f32 %v545, 0.0
        %v930 = vmin.f32 %v866, 1.0
        %v931 = vmin.f32 %v867, 1.0
        %v932 = vmin.f32 %v868, 1.0
        %v933 = vmin.f32 %v869, 1.0
        %v934 = vmin.f32 %v870, 1.0
        %v935 = vmin.f32 %v871, 1.0
        %v936 = vmin.f32 %v872, 1.0
        %v937 = vmin.f32 %v873, 1.0
        %v938 = vmin.f32 %v874, 1.0
        %v939 = vmin.f32 %v875, 1.0
        %v940 = vmin.f32 %v876, 1.0
        %v941 = vmin.f32 %v877, 1.0
        %v942 = vmin.f32 %v878, 1.0
        %v943 = vmin.f32 %v879, 1.0
        %v944 = vmin.f32 %v880, 1.0
        %v945 = vmin.f32 %v881, 1.0
        %v946 = vmin.f32 %v882, 1.0
        %v947 = vmin.f32 %v883, 1.0
        %v948 = vmin.f32 %v884, 1.0
        %v949 = vmin.f32 %v885, 1.0
        %v950 = vmin.f32 %v886, 1.0
        %v951 = vmin.f32 %v887, 1.0
        %v952 = vmin.f32 %v888, 1.0
        %v953 = vmin.f32 %v889, 1.0
        %v954 = vmin.f32 %v890, 1.0
        %v955 = vmin.f32 %v891, 1.0
        %v956 = vmin.f32 %v892, 1.0
        %v957 = vmin.f32 %v893, 1.0
        %v958 = vmin.f32 %v894, 1.0
        %v959 = vmin.f32 %v895, 1.0
        %v960 = vmin.f32 %v896, 1.0
        %v961 = vmin.f32 %v897, 1.0
        %v962 = vmin.f32 %v898, 1.0
        %v963 = vmin.f32 %v899, 1.0
        %v964 = vmin.f32 %v900, 1.0
        %v965 = vmin.f32 %v901, 1.0
        %v966 = vmin.f32 %v902, 1.0
        %v967 = vmin.f32 %v903, 1.0
        %v968 = vmin.f32 %v904, 1.0
        %v969 = vmin.f32 %v905, 1.0
        %v970 = vmin.f32 %v906, 1.0
        %v971 = vmin.f32 %v907, 1.0
        %v972 = vmin.f32 %v908, 1.0
        %v973 = vmin.f32 %v909, 1.0
        %v974 = vmin.f32 %v910, 1.0
        %v975 = vmin.f32 %v911, 1.0
        %v976 = vmin.f32 %v912, 1.0
        %v977 = vmin.f32 %v913, 1.0
        %v978 = vmin.f32 %v914, 1.0
        %v979 = vmin.f32 %v915, 1.0
        %v980 = vmin.f32 %v916, 1.0
        %v981 = vmin.f32 %v917, 1.0
        %v982 = vmin.f32 %v918, 1.0
        %v983 = vmin.f32 %v919, 1.0
        %v984 = vmin.f32 %v920, 1.0
        %v985 = vmin.f32 %v921, 1.0
        %v986 = vmin.f32 %v922, 1.0
        %v987 = vmin.f32 %v923, 1.0
        %v988 = vmin.f32 %v924, 1.0
        %v989 = vmin.f32 %v925, 1.0
        %v990 = vmin.f32 %v926, 1.0
        %v991 = vmin.f32 %v927, 1.0
        %v992 = vmin.f32 %v928, 1.0
        %v993 = vmin.f32 %v929, 1.0
        %v994 = vpack.c.bf16 %v931, %v930
        %v995 = vpack.c.bf16 %v933, %v932
        %v996 = vpack.c.bf16 %v935, %v934
        %v997 = vpack.c.bf16 %v937, %v936
        %v998 = vpack.c.bf16 %v939, %v938
        %v999 = vpack.c.bf16 %v941, %v940
        %v1000 = vpack.c.bf16 %v943, %v942
        %v1001 = vpack.c.bf16 %v945, %v944
        %v1002 = vpack.c.bf16 %v947, %v946
        %v1003 = vpack.c.bf16 %v949, %v948
        %v1004 = vpack.c.bf16 %v951, %v950
        %v1005 = vpack.c.bf16 %v953, %v952
        %v1006 = vpack.c.bf16 %v955, %v954
        %v1007 = vpack.c.bf16 %v957, %v956
        %v1008 = vpack.c.bf16 %v959, %v958
        %v1009 = vpack.c.bf16 %v961, %v960
        %v1010 = vpack.c.bf16 %v963, %v962
        %v1011 = vpack.c.bf16 %v965, %v964
        %v1012 = vpack.c.bf16 %v967, %v966
        %v1013 = vpack.c.bf16 %v969, %v968
        %v1014 = vpack.c.bf16 %v971, %v970
        %v1015 = vpack.c.bf16 %v973, %v972
        %v1016 = vpack.c.bf16 %v975, %v974
        %v1017 = vpack.c.bf16 %v977, %v976
        %v1018 = vpack.c.bf16 %v979, %v978
        %v1019 = vpack.c.bf16 %v981, %v980
        %v1020 = vpack.c.bf16 %v983, %v982
        %v1021 = vpack.c.bf16 %v985, %v984
        %v1022 = vpack.c.bf16 %v987, %v986
        %v1023 = vpack.c.bf16 %v989, %v988
        %v1024 = vpack.c.bf16 %v991, %v990
        %v1025 = vpack.c.bf16 %v993, %v992
        %v1026 = vpack.c.bf16 %v803, %v802
        %v1027 = vpack.c.bf16 %v805, %v804
        %v1028 = vpack.c.bf16 %v807, %v806
        %v1029 = vpack.c.bf16 %v809, %v808
        %v1030 = vpack.c.bf16 %v811, %v810
        %v1031 = vpack.c.bf16 %v813, %v812
        %v1032 = vpack.c.bf16 %v815, %v814
        %v1033 = vpack.c.bf16 %v817, %v816
        %v1034 = vpack.c.bf16 %v819, %v818
        %v1035 = vpack.c.bf16 %v821, %v820
        %v1036 = vpack.c.bf16 %v823, %v822
        %v1037 = vpack.c.bf16 %v825, %v824
        %v1038 = vpack.c.bf16 %v827, %v826
        %v1039 = vpack.c.bf16 %v829, %v828
        %v1040 = vpack.c.bf16 %v831, %v830
        %v1041 = vpack.c.bf16 %v833, %v832
        %v1042 = vpack.c.bf16 %v835, %v834
        %v1043 = vpack.c.bf16 %v837, %v836
        %v1044 = vpack.c.bf16 %v839, %v838
        %v1045 = vpack.c.bf16 %v841, %v840
        %v1046 = vpack.c.bf16 %v843, %v842
        %v1047 = vpack.c.bf16 %v845, %v844
        %v1048 = vpack.c.bf16 %v847, %v846
        %v1049 = vpack.c.bf16 %v849, %v848
        %v1050 = vpack.c.bf16 %v851, %v850
        %v1051 = vpack.c.bf16 %v853, %v852
        %v1052 = vpack.c.bf16 %v855, %v854
        %v1053 = vpack.c.bf16 %v857, %v856
        %v1054 = vpack.c.bf16 %v859, %v858
        %v1055 = vpack.c.bf16 %v861, %v860
        %v1056 = vpack.c.bf16 %v863, %v862
        %v1057 = vpack.c.bf16 %v865, %v864
        %v1058 = vpack.c.bf16 %v675, %v674
        %v1059 = vpack.c.bf16 %v677, %v676
        %v1060 = vpack.c.bf16 %v679, %v678
        %v1061 = vpack.c.bf16 %v681, %v680
        %v1062 = vpack.c.bf16 %v683, %v682
        %v1063 = vpack.c.bf16 %v685, %v684
        %v1064 = vpack.c.bf16 %v687, %v686
        %v1065 = vpack.c.bf16 %v689, %v688
        %v1066 = vpack.c.bf16 %v691, %v690
        %v1067 = vpack.c.bf16 %v693, %v692
        %v1068 = vpack.c.bf16 %v695, %v694
        %v1069 = vpack.c.bf16 %v697, %v696
        %v1070 = vpack.c.bf16 %v699, %v698
        %v1071 = vpack.c.bf16 %v701, %v700
        %v1072 = vpack.c.bf16 %v703, %v702
        %v1073 = vpack.c.bf16 %v705, %v704
        %v1074 = vpack.c.bf16 %v707, %v706
        %v1075 = vpack.c.bf16 %v709, %v708
        %v1076 = vpack.c.bf16 %v711, %v710
        %v1077 = vpack.c.bf16 %v713, %v712
        %v1078 = vpack.c.bf16 %v715, %v714
        %v1079 = vpack.c.bf16 %v717, %v716
        %v1080 = vpack.c.bf16 %v719, %v718
        %v1081 = vpack.c.bf16 %v721, %v720
        %v1082 = vpack.c.bf16 %v723, %v722
        %v1083 = vpack.c.bf16 %v725, %v724
        %v1084 = vpack.c.bf16 %v727, %v726
        %v1085 = vpack.c.bf16 %v729, %v728
        %v1086 = vpack.c.bf16 %v731, %v730
        %v1087 = vpack.c.bf16 %v733, %v732
        %v1088 = vpack.c.bf16 %v735, %v734
        %v1089 = vpack.c.bf16 %v737, %v736
        %v1186 = vunpack.c.l.b16 %v994
        %v1187 = vunpack.c.h.b16 %v994
        %v1188 = vunpack.c.l.b16 %v995
        %v1189 = vunpack.c.h.b16 %v995
        %v1190 = vunpack.c.l.b16 %v996
        %v1191 = vunpack.c.h.b16 %v996
        %v1192 = vunpack.c.l.b16 %v997
        %v1193 = vunpack.c.h.b16 %v997
        %v1194 = vunpack.c.l.b16 %v998
        %v1195 = vunpack.c.h.b16 %v998
        %v1196 = vunpack.c.l.b16 %v999
        %v1197 = vunpack.c.h.b16 %v999
        %v1198 = vunpack.c.l.b16 %v1000
        %v1199 = vunpack.c.h.b16 %v1000
        %v1200 = vunpack.c.l.b16 %v1001
        %v1201 = vunpack.c.h.b16 %v1001
        %v1202 = vunpack.c.l.b16 %v1002
        %v1203 = vunpack.c.h.b16 %v1002
        %v1204 = vunpack.c.l.b16 %v1003
        %v1205 = vunpack.c.h.b16 %v1003
        %v1206 = vunpack.c.l.b16 %v1004
        %v1207 = vunpack.c.h.b16 %v1004
        %v1208 = vunpack.c.l.b16 %v1005
        %v1209 = vunpack.c.h.b16 %v1005
        %v1210 = vunpack.c.l.b16 %v1006
        %v1211 = vunpack.c.h.b16 %v1006
        %v1212 = vunpack.c.l.b16 %v1007
        %v1213 = vunpack.c.h.b16 %v1007
        %v1214 = vunpack.c.l.b16 %v1008
        %v1215 = vunpack.c.h.b16 %v1008
        %v1216 = vunpack.c.l.b16 %v1009
        %v1217 = vunpack.c.h.b16 %v1009
        %v1218 = vunpack.c.l.b16 %v1010
        %v1219 = vunpack.c.h.b16 %v1010
        %v1220 = vunpack.c.l.b16 %v1011
        %v1221 = vunpack.c.h.b16 %v1011
        %v1222 = vunpack.c.l.b16 %v1012
        %v1223 = vunpack.c.h.b16 %v1012
        %v1224 = vunpack.c.l.b16 %v1013
        %v1225 = vunpack.c.h.b16 %v1013
        %v1226 = vunpack.c.l.b16 %v1014
        %v1227 = vunpack.c.h.b16 %v1014
        %v1228 = vunpack.c.l.b16 %v1015
        %v1229 = vunpack.c.h.b16 %v1015
        %v1230 = vunpack.c.l.b16 %v1016
        %v1231 = vunpack.c.h.b16 %v1016
        %v1232 = vunpack.c.l.b16 %v1017
        %v1233 = vunpack.c.h.b16 %v1017
        %v1234 = vunpack.c.l.b16 %v1018
        %v1235 = vunpack.c.h.b16 %v1018
        %v1236 = vunpack.c.l.b16 %v1019
        %v1237 = vunpack.c.h.b16 %v1019
        %v1238 = vunpack.c.l.b16 %v1020
        %v1239 = vunpack.c.h.b16 %v1020
        %v1240 = vunpack.c.l.b16 %v1021
        %v1241 = vunpack.c.h.b16 %v1021
        %v1242 = vunpack.c.l.b16 %v1022
        %v1243 = vunpack.c.h.b16 %v1022
        %v1244 = vunpack.c.l.b16 %v1023
        %v1245 = vunpack.c.h.b16 %v1023
        %v1246 = vunpack.c.l.b16 %v1024
        %v1247 = vunpack.c.h.b16 %v1024
        %v1248 = vunpack.c.l.b16 %v1025
        %v1249 = vunpack.c.h.b16 %v1025
        %v1250 = vunpack.c.l.b16 %v1026
        %v1251 = vunpack.c.h.b16 %v1026
        %v1252 = vunpack.c.l.b16 %v1027
        %v1253 = vunpack.c.h.b16 %v1027
        %v1254 = vunpack.c.l.b16 %v1028
        %v1255 = vunpack.c.h.b16 %v1028
        %v1256 = vunpack.c.l.b16 %v1029
        %v1257 = vunpack.c.h.b16 %v1029
        %v1258 = vunpack.c.l.b16 %v1030
        %v1259 = vunpack.c.h.b16 %v1030
        %v1260 = vunpack.c.l.b16 %v1031
        %v1261 = vunpack.c.h.b16 %v1031
        %v1262 = vunpack.c.l.b16 %v1032
        %v1263 = vunpack.c.h.b16 %v1032
        %v1264 = vunpack.c.l.b16 %v1033
        %v1265 = vunpack.c.h.b16 %v1033
        %v1266 = vunpack.c.l.b16 %v1034
        %v1267 = vunpack.c.h.b16 %v1034
        %v1268 = vunpack.c.l.b16 %v1035
        %v1269 = vunpack.c.h.b16 %v1035
        %v1270 = vunpack.c.l.b16 %v1036
        %v1271 = vunpack.c.h.b16 %v1036
        %v1272 = vunpack.c.l.b16 %v1037
        %v1273 = vunpack.c.h.b16 %v1037
        %v1274 = vunpack.c.l.b16 %v1038
        %v1275 = vunpack.c.h.b16 %v1038
        %v1276 = vunpack.c.l.b16 %v1039
        %v1277 = vunpack.c.h.b16 %v1039
        %v1278 = vunpack.c.l.b16 %v1040
        %v1279 = vunpack.c.h.b16 %v1040
        %v1280 = vunpack.c.l.b16 %v1041
        %v1281 = vunpack.c.h.b16 %v1041
        %v1282 = vunpack.c.l.b16 %v1042
        %v1283 = vunpack.c.h.b16 %v1042
        %v1284 = vunpack.c.l.b16 %v1043
        %v1285 = vunpack.c.h.b16 %v1043
        %v1286 = vunpack.c.l.b16 %v1044
        %v1287 = vunpack.c.h.b16 %v1044
        %v1288 = vunpack.c.l.b16 %v1045
        %v1289 = vunpack.c.h.b16 %v1045
        %v1290 = vunpack.c.l.b16 %v1046
        %v1291 = vunpack.c.h.b16 %v1046
        %v1292 = vunpack.c.l.b16 %v1047
        %v1293 = vunpack.c.h.b16 %v1047
        %v1294 = vunpack.c.l.b16 %v1048
        %v1295 = vunpack.c.h.b16 %v1048
        %v1296 = vunpack.c.l.b16 %v1049
        %v1297 = vunpack.c.h.b16 %v1049
        %v1298 = vunpack.c.l.b16 %v1050
        %v1299 = vunpack.c.h.b16 %v1050
        %v1300 = vunpack.c.l.b16 %v1051
        %v1301 = vunpack.c.h.b16 %v1051
        %v1302 = vunpack.c.l.b16 %v1052
        %v1303 = vunpack.c.h.b16 %v1052
        %v1304 = vunpack.c.l.b16 %v1053
        %v1305 = vunpack.c.h.b16 %v1053
        %v1306 = vunpack.c.l.b16 %v1054
        %v1307 = vunpack.c.h.b16 %v1054
        %v1308 = vunpack.c.l.b16 %v1055
        %v1309 = vunpack.c.h.b16 %v1055
        %v1310 = vunpack.c.l.b16 %v1056
        %v1311 = vunpack.c.h.b16 %v1056
        %v1312 = vunpack.c.l.b16 %v1057
        %v1313 = vunpack.c.h.b16 %v1057
        %v1314 = vunpack.c.l.b16 %v1058
        %v1315 = vunpack.c.h.b16 %v1058
        %v1316 = vunpack.c.l.b16 %v1059
        %v1317 = vunpack.c.h.b16 %v1059
        %v1318 = vunpack.c.l.b16 %v1060
        %v1319 = vunpack.c.h.b16 %v1060
        %v1320 = vunpack.c.l.b16 %v1061
        %v1321 = vunpack.c.h.b16 %v1061
        %v1322 = vunpack.c.l.b16 %v1062
        %v1323 = vunpack.c.h.b16 %v1062
        %v1324 = vunpack.c.l.b16 %v1063
        %v1325 = vunpack.c.h.b16 %v1063
        %v1326 = vunpack.c.l.b16 %v1064
        %v1327 = vunpack.c.h.b16 %v1064
        %v1328 = vunpack.c.l.b16 %v1065
        %v1329 = vunpack.c.h.b16 %v1065
        %v1330 = vunpack.c.l.b16 %v1066
        %v1331 = vunpack.c.h.b16 %v1066
        %v1332 = vunpack.c.l.b16 %v1067
        %v1333 = vunpack.c.h.b16 %v1067
        %v1334 = vunpack.c.l.b16 %v1068
        %v1335 = vunpack.c.h.b16 %v1068
        %v1336 = vunpack.c.l.b16 %v1069
        %v1337 = vunpack.c.h.b16 %v1069
        %v1338 = vunpack.c.l.b16 %v1070
        %v1339 = vunpack.c.h.b16 %v1070
        %v1340 = vunpack.c.l.b16 %v1071
        %v1341 = vunpack.c.h.b16 %v1071
        %v1342 = vunpack.c.l.b16 %v1072
        %v1343 = vunpack.c.h.b16 %v1072
        %v1344 = vunpack.c.l.b16 %v1073
        %v1345 = vunpack.c.h.b16 %v1073
        %v1346 = vunpack.c.l.b16 %v1074
        %v1347 = vunpack.c.h.b16 %v1074
        %v1348 = vunpack.c.l.b16 %v1075
        %v1349 = vunpack.c.h.b16 %v1075
        %v1350 = vunpack.c.l.b16 %v1076
        %v1351 = vunpack.c.h.b16 %v1076
        %v1352 = vunpack.c.l.b16 %v1077
        %v1353 = vunpack.c.h.b16 %v1077
        %v1354 = vunpack.c.l.b16 %v1078
        %v1355 = vunpack.c.h.b16 %v1078
        %v1356 = vunpack.c.l.b16 %v1079
        %v1357 = vunpack.c.h.b16 %v1079
        %v1358 = vunpack.c.l.b16 %v1080
        %v1359 = vunpack.c.h.b16 %v1080
        %v1360 = vunpack.c.l.b16 %v1081
        %v1361 = vunpack.c.h.b16 %v1081
        %v1362 = vunpack.c.l.b16 %v1082
        %v1363 = vunpack.c.h.b16 %v1082
        %v1364 = vunpack.c.l.b16 %v1083
        %v1365 = vunpack.c.h.b16 %v1083
        %v1366 = vunpack.c.l.b16 %v1084
        %v1367 = vunpack.c.h.b16 %v1084
        %v1368 = vunpack.c.l.b16 %v1085
        %v1369 = vunpack.c.h.b16 %v1085
        %v1370 = vunpack.c.l.b16 %v1086
        %v1371 = vunpack.c.h.b16 %v1086
        %v1372 = vunpack.c.l.b16 %v1087
        %v1373 = vunpack.c.h.b16 %v1087
        %v1374 = vunpack.c.l.b16 %v1088
        %v1375 = vunpack.c.h.b16 %v1088
        %v1376 = vunpack.c.l.b16 %v1089
        %v1377 = vunpack.c.h.b16 %v1089
        %v1378 = vpack.c.b16 %v1186, %v1186
        %v1379 = vpack.c.b16 %v1187, %v1187
        %v1380 = vpack.c.b16 %v1188, %v1188
        %v1381 = vpack.c.b16 %v1189, %v1189
        %v1382 = vpack.c.b16 %v1190, %v1190
        %v1383 = vpack.c.b16 %v1191, %v1191
        %v1384 = vpack.c.b16 %v1192, %v1192
        %v1385 = vpack.c.b16 %v1193, %v1193
        %v1386 = vpack.c.b16 %v1194, %v1194
        %v1387 = vpack.c.b16 %v1195, %v1195
        %v1388 = vpack.c.b16 %v1196, %v1196
        %v1389 = vpack.c.b16 %v1197, %v1197
        %v1390 = vpack.c.b16 %v1198, %v1198
        %v1391 = vpack.c.b16 %v1199, %v1199
        %v1392 = vpack.c.b16 %v1200, %v1200
        %v1393 = vpack.c.b16 %v1201, %v1201
        %v1394 = vpack.c.b16 %v1202, %v1202
        %v1395 = vpack.c.b16 %v1203, %v1203
        %v1396 = vpack.c.b16 %v1204, %v1204
        %v1397 = vpack.c.b16 %v1205, %v1205
        %v1398 = vpack.c.b16 %v1206, %v1206
        %v1399 = vpack.c.b16 %v1207, %v1207
        %v1400 = vpack.c.b16 %v1208, %v1208
        %v1401 = vpack.c.b16 %v1209, %v1209
        %v1402 = vpack.c.b16 %v1210, %v1210
        %v1403 = vpack.c.b16 %v1211, %v1211
        %v1404 = vpack.c.b16 %v1212, %v1212
        %v1405 = vpack.c.b16 %v1213, %v1213
        %v1406 = vpack.c.b16 %v1214, %v1214
        %v1407 = vpack.c.b16 %v1215, %v1215
        %v1408 = vpack.c.b16 %v1216, %v1216
        %v1409 = vpack.c.b16 %v1217, %v1217
        %v1410 = vpack.c.b16 %v1218, %v1218
        %v1411 = vpack.c.b16 %v1219, %v1219
        %v1412 = vpack.c.b16 %v1220, %v1220
        %v1413 = vpack.c.b16 %v1221, %v1221
        %v1414 = vpack.c.b16 %v1222, %v1222
        %v1415 = vpack.c.b16 %v1223, %v1223
        %v1416 = vpack.c.b16 %v1224, %v1224
        %v1417 = vpack.c.b16 %v1225, %v1225
        %v1418 = vpack.c.b16 %v1226, %v1226
        %v1419 = vpack.c.b16 %v1227, %v1227
        %v1420 = vpack.c.b16 %v1228, %v1228
        %v1421 = vpack.c.b16 %v1229, %v1229
        %v1422 = vpack.c.b16 %v1230, %v1230
        %v1423 = vpack.c.b16 %v1231, %v1231
        %v1424 = vpack.c.b16 %v1232, %v1232
        %v1425 = vpack.c.b16 %v1233, %v1233
        %v1426 = vpack.c.b16 %v1234, %v1234
        %v1427 = vpack.c.b16 %v1235, %v1235
        %v1428 = vpack.c.b16 %v1236, %v1236
        %v1429 = vpack.c.b16 %v1237, %v1237
        %v1430 = vpack.c.b16 %v1238, %v1238
        %v1431 = vpack.c.b16 %v1239, %v1239
        %v1432 = vpack.c.b16 %v1240, %v1240
        %v1433 = vpack.c.b16 %v1241, %v1241
        %v1434 = vpack.c.b16 %v1242, %v1242
        %v1435 = vpack.c.b16 %v1243, %v1243
        %v1436 = vpack.c.b16 %v1244, %v1244
        %v1437 = vpack.c.b16 %v1245, %v1245
        %v1438 = vpack.c.b16 %v1246, %v1246
        %v1439 = vpack.c.b16 %v1247, %v1247
        %v1440 = vpack.c.b16 %v1248, %v1248
        %v1441 = vpack.c.b16 %v1249, %v1249
        %v1442 = vpack.c.b16 %v1250, %v1250
        %v1443 = vpack.c.b16 %v1251, %v1251
        %v1444 = vpack.c.b16 %v1252, %v1252
        %v1445 = vpack.c.b16 %v1253, %v1253
        %v1446 = vpack.c.b16 %v1254, %v1254
        %v1447 = vpack.c.b16 %v1255, %v1255
        %v1448 = vpack.c.b16 %v1256, %v1256
        %v1449 = vpack.c.b16 %v1257, %v1257
        %v1450 = vpack.c.b16 %v1258, %v1258
        %v1451 = vpack.c.b16 %v1259, %v1259
        %v1452 = vpack.c.b16 %v1260, %v1260
        %v1453 = vpack.c.b16 %v1261, %v1261
        %v1454 = vpack.c.b16 %v1262, %v1262
        %v1455 = vpack.c.b16 %v1263, %v1263
        %v1456 = vpack.c.b16 %v1264, %v1264
        %v1457 = vpack.c.b16 %v1265, %v1265
        %v1458 = vpack.c.b16 %v1266, %v1266
        %v1459 = vpack.c.b16 %v1267, %v1267
        %v1460 = vpack.c.b16 %v1268, %v1268
        %v1461 = vpack.c.b16 %v1269, %v1269
        %v1462 = vpack.c.b16 %v1270, %v1270
        %v1463 = vpack.c.b16 %v1271, %v1271
        %v1464 = vpack.c.b16 %v1272, %v1272
        %v1465 = vpack.c.b16 %v1273, %v1273
        %v1466 = vpack.c.b16 %v1274, %v1274
        %v1467 = vpack.c.b16 %v1275, %v1275
        %v1468 = vpack.c.b16 %v1276, %v1276
        %v1469 = vpack.c.b16 %v1277, %v1277
        %v1470 = vpack.c.b16 %v1278, %v1278
        %v1471 = vpack.c.b16 %v1279, %v1279
        %v1472 = vpack.c.b16 %v1280, %v1280
        %v1473 = vpack.c.b16 %v1281, %v1281
        %v1474 = vpack.c.b16 %v1282, %v1282
        %v1475 = vpack.c.b16 %v1283, %v1283
        %v1476 = vpack.c.b16 %v1284, %v1284
        %v1477 = vpack.c.b16 %v1285, %v1285
        %v1478 = vpack.c.b16 %v1286, %v1286
        %v1479 = vpack.c.b16 %v1287, %v1287
        %v1480 = vpack.c.b16 %v1288, %v1288
        %v1481 = vpack.c.b16 %v1289, %v1289
        %v1482 = vpack.c.b16 %v1290, %v1290
        %v1483 = vpack.c.b16 %v1291, %v1291
        %v1484 = vpack.c.b16 %v1292, %v1292
        %v1485 = vpack.c.b16 %v1293, %v1293
        %v1486 = vpack.c.b16 %v1294, %v1294
        %v1487 = vpack.c.b16 %v1295, %v1295
        %v1488 = vpack.c.b16 %v1296, %v1296
        %v1489 = vpack.c.b16 %v1297, %v1297
        %v1490 = vpack.c.b16 %v1298, %v1298
        %v1491 = vpack.c.b16 %v1299, %v1299
        %v1492 = vpack.c.b16 %v1300, %v1300
        %v1493 = vpack.c.b16 %v1301, %v1301
        %v1494 = vpack.c.b16 %v1302, %v1302
        %v1495 = vpack.c.b16 %v1303, %v1303
        %v1496 = vpack.c.b16 %v1304, %v1304
        %v1497 = vpack.c.b16 %v1305, %v1305
        %v1498 = vpack.c.b16 %v1306, %v1306
        %v1499 = vpack.c.b16 %v1307, %v1307
        %v1500 = vpack.c.b16 %v1308, %v1308
        %v1501 = vpack.c.b16 %v1309, %v1309
        %v1502 = vpack.c.b16 %v1310, %v1310
        %v1503 = vpack.c.b16 %v1311, %v1311
        %v1504 = vpack.c.b16 %v1312, %v1312
        %v1505 = vpack.c.b16 %v1313, %v1313
        %v1506 = vpack.c.b16 %v1314, %v1314
        %v1507 = vpack.c.b16 %v1315, %v1315
        %v1508 = vpack.c.b16 %v1316, %v1316
        %v1509 = vpack.c.b16 %v1317, %v1317
        %v1510 = vpack.c.b16 %v1318, %v1318
        %v1511 = vpack.c.b16 %v1319, %v1319
        %v1512 = vpack.c.b16 %v1320, %v1320
        %v1513 = vpack.c.b16 %v1321, %v1321
        %v1514 = vpack.c.b16 %v1322, %v1322
        %v1515 = vpack.c.b16 %v1323, %v1323
        %v1516 = vpack.c.b16 %v1324, %v1324
        %v1517 = vpack.c.b16 %v1325, %v1325
        %v1518 = vpack.c.b16 %v1326, %v1326
        %v1519 = vpack.c.b16 %v1327, %v1327
        %v1520 = vpack.c.b16 %v1328, %v1328
        %v1521 = vpack.c.b16 %v1329, %v1329
        %v1522 = vpack.c.b16 %v1330, %v1330
        %v1523 = vpack.c.b16 %v1331, %v1331
        %v1524 = vpack.c.b16 %v1332, %v1332
        %v1525 = vpack.c.b16 %v1333, %v1333
        %v1526 = vpack.c.b16 %v1334, %v1334
        %v1527 = vpack.c.b16 %v1335, %v1335
        %v1528 = vpack.c.b16 %v1336, %v1336
        %v1529 = vpack.c.b16 %v1337, %v1337
        %v1530 = vpack.c.b16 %v1338, %v1338
        %v1531 = vpack.c.b16 %v1339, %v1339
        %v1532 = vpack.c.b16 %v1340, %v1340
        %v1533 = vpack.c.b16 %v1341, %v1341
        %v1534 = vpack.c.b16 %v1342, %v1342
        %v1535 = vpack.c.b16 %v1343, %v1343
        %v1536 = vpack.c.b16 %v1344, %v1344
        %v1537 = vpack.c.b16 %v1345, %v1345
        %v1538 = vpack.c.b16 %v1346, %v1346
        %v1539 = vpack.c.b16 %v1347, %v1347
        %v1540 = vpack.c.b16 %v1348, %v1348
        %v1541 = vpack.c.b16 %v1349, %v1349
        %v1542 = vpack.c.b16 %v1350, %v1350
        %v1543 = vpack.c.b16 %v1351, %v1351
        %v1544 = vpack.c.b16 %v1352, %v1352
        %v1545 = vpack.c.b16 %v1353, %v1353
        %v1546 = vpack.c.b16 %v1354, %v1354
        %v1547 = vpack.c.b16 %v1355, %v1355
        %v1548 = vpack.c.b16 %v1356, %v1356
        %v1549 = vpack.c.b16 %v1357, %v1357
        %v1550 = vpack.c.b16 %v1358, %v1358
        %v1551 = vpack.c.b16 %v1359, %v1359
        %v1552 = vpack.c.b16 %v1360, %v1360
        %v1553 = vpack.c.b16 %v1361, %v1361
        %v1554 = vpack.c.b16 %v1362, %v1362
        %v1555 = vpack.c.b16 %v1363, %v1363
        %v1556 = vpack.c.b16 %v1364, %v1364
        %v1557 = vpack.c.b16 %v1365, %v1365
        %v1558 = vpack.c.b16 %v1366, %v1366
        %v1559 = vpack.c.b16 %v1367, %v1367
        %v1560 = vpack.c.b16 %v1368, %v1368
        %v1561 = vpack.c.b16 %v1369, %v1369
        %v1562 = vpack.c.b16 %v1370, %v1370
        %v1563 = vpack.c.b16 %v1371, %v1371
        %v1564 = vpack.c.b16 %v1372, %v1372
        %v1565 = vpack.c.b16 %v1373, %v1373
        %v1566 = vpack.c.b16 %v1374, %v1374
        %v1567 = vpack.c.b16 %v1375, %v1375
        %v1568 = vpack.c.b16 %v1376, %v1376
        %v1569 = vpack.c.b16 %v1377, %v1377
        %1762 = vst [vmem:[%s159] sm:$0xf] %v1378
        %1763 = vst [vmem:[%s159 + $0x4] sm:$0xf] %v1379
        %1764 = vst [vmem:[%s159 + $0x8] sm:$0xf] %v1380
        %1765 = vst [vmem:[%s159 + $0xc] sm:$0xf] %v1381
        %1766 = vst [vmem:[%s159 + $0x10] sm:$0xf] %v1382
        %1767 = vst [vmem:[%s159 + $0x14] sm:$0xf] %v1383
        %1768 = vst [vmem:[%s159 + $0x18] sm:$0xf] %v1384
        %1769 = vst [vmem:[%s159 + $0x1c] sm:$0xf] %v1385
        %1770 = vst [vmem:[%s159 + $0x20] sm:$0xf] %v1386
        %1771 = vst [vmem:[%s159 + $0x24] sm:$0xf] %v1387
        %1772 = vst [vmem:[%s159 + $0x28] sm:$0xf] %v1388
        %1773 = vst [vmem:[%s159 + $0x2c] sm:$0xf] %v1389
        %1774 = vst [vmem:[%s159 + $0x30] sm:$0xf] %v1390
        %1775 = vst [vmem:[%s159 + $0x34] sm:$0xf] %v1391
        %1776 = vst [vmem:[%s159 + $0x38] sm:$0xf] %v1392
        %1777 = vst [vmem:[%s159 + $0x3c] sm:$0xf] %v1393
        %1778 = vst [vmem:[%s159 + $0x40] sm:$0xf] %v1394
        %1779 = vst [vmem:[%s159 + $0x44] sm:$0xf] %v1395
        %1780 = vst [vmem:[%s159 + $0x48] sm:$0xf] %v1396
        %1781 = vst [vmem:[%s159 + $0x4c] sm:$0xf] %v1397
        %1782 = vst [vmem:[%s159 + $0x50] sm:$0xf] %v1398
        %1783 = vst [vmem:[%s159 + $0x54] sm:$0xf] %v1399
        %1784 = vst [vmem:[%s159 + $0x58] sm:$0xf] %v1400
        %1785 = vst [vmem:[%s159 + $0x5c] sm:$0xf] %v1401
        %1786 = vst [vmem:[%s159 + $0x60] sm:$0xf] %v1402
        %1787 = vst [vmem:[%s159 + $0x64] sm:$0xf] %v1403
        %1788 = vst [vmem:[%s159 + $0x68] sm:$0xf] %v1404
        %1789 = vst [vmem:[%s159 + $0x6c] sm:$0xf] %v1405
        %1790 = vst [vmem:[%s159 + $0x70] sm:$0xf] %v1406
        %1791 = vst [vmem:[%s159 + $0x74] sm:$0xf] %v1407
        %1792 = vst [vmem:[%s159 + $0x78] sm:$0xf] %v1408
        %1793 = vst [vmem:[%s159 + $0x7c] sm:$0xf] %v1409
        %1794 = vst [vmem:[%s159 + $0x80] sm:$0xf] %v1410
        %1795 = vst [vmem:[%s159 + $0x84] sm:$0xf] %v1411
        %1796 = vst [vmem:[%s159 + $0x88] sm:$0xf] %v1412
        %1797 = vst [vmem:[%s159 + $0x8c] sm:$0xf] %v1413
        %1798 = vst [vmem:[%s159 + $0x90] sm:$0xf] %v1414
        %1799 = vst [vmem:[%s159 + $0x94] sm:$0xf] %v1415
        %1800 = vst [vmem:[%s159 + $0x98] sm:$0xf] %v1416
        %1801 = vst [vmem:[%s159 + $0x9c] sm:$0xf] %v1417
        %1802 = vst [vmem:[%s159 + $0xa0] sm:$0xf] %v1418
        %1803 = vst [vmem:[%s159 + $0xa4] sm:$0xf] %v1419
        %1804 = vst [vmem:[%s159 + $0xa8] sm:$0xf] %v1420
        %1805 = vst [vmem:[%s159 + $0xac] sm:$0xf] %v1421
        %1806 = vst [vmem:[%s159 + $0xb0] sm:$0xf] %v1422
        %1807 = vst [vmem:[%s159 + $0xb4] sm:$0xf] %v1423
        %1808 = vst [vmem:[%s159 + $0xb8] sm:$0xf] %v1424
        %1809 = vst [vmem:[%s159 + $0xbc] sm:$0xf] %v1425
        %1810 = vst [vmem:[%s159 + $0xc0] sm:$0xf] %v1426
        %1811 = vst [vmem:[%s159 + $0xc4] sm:$0xf] %v1427
        %1812 = vst [vmem:[%s159 + $0xc8] sm:$0xf] %v1428
        %1813 = vst [vmem:[%s159 + $0xcc] sm:$0xf] %v1429
        %1814 = vst [vmem:[%s159 + $0xd0] sm:$0xf] %v1430
        %1815 = vst [vmem:[%s159 + $0xd4] sm:$0xf] %v1431
        %1816 = vst [vmem:[%s159 + $0xd8] sm:$0xf] %v1432
        %1817 = vst [vmem:[%s159 + $0xdc] sm:$0xf] %v1433
        %1818 = vst [vmem:[%s159 + $0xe0] sm:$0xf] %v1434
        %1819 = vst [vmem:[%s159 + $0xe4] sm:$0xf] %v1435
        %1820 = vst [vmem:[%s159 + $0xe8] sm:$0xf] %v1436
        %1821 = vst [vmem:[%s159 + $0xec] sm:$0xf] %v1437
        %1822 = vst [vmem:[%s159 + $0xf0] sm:$0xf] %v1438
        %1823 = vst [vmem:[%s159 + $0xf4] sm:$0xf] %v1439
        %1824 = vst [vmem:[%s159 + $0xf8] sm:$0xf] %v1440
        %1825 = vst [vmem:[%s159 + $0xfc] sm:$0xf] %v1441
        %1826 = vst [vmem:[%s159 + $0x100] sm:$0xf] %v1442
        %1827 = vst [vmem:[%s159 + $0x104] sm:$0xf] %v1443
        %1828 = vst [vmem:[%s159 + $0x108] sm:$0xf] %v1444
        %1829 = vst [vmem:[%s159 + $0x10c] sm:$0xf] %v1445
        %1830 = vst [vmem:[%s159 + $0x110] sm:$0xf] %v1446
        %1831 = vst [vmem:[%s159 + $0x114] sm:$0xf] %v1447
        %1832 = vst [vmem:[%s159 + $0x118] sm:$0xf] %v1448
        %1833 = vst [vmem:[%s159 + $0x11c] sm:$0xf] %v1449
        %1834 = vst [vmem:[%s159 + $0x120] sm:$0xf] %v1450
        %1835 = vst [vmem:[%s159 + $0x124] sm:$0xf] %v1451
        %1836 = vst [vmem:[%s159 + $0x128] sm:$0xf] %v1452
        %1837 = vst [vmem:[%s159 + $0x12c] sm:$0xf] %v1453
        %1838 = vst [vmem:[%s159 + $0x130] sm:$0xf] %v1454
        %1839 = vst [vmem:[%s159 + $0x134] sm:$0xf] %v1455
        %1840 = vst [vmem:[%s159 + $0x138] sm:$0xf] %v1456
        %1841 = vst [vmem:[%s159 + $0x13c] sm:$0xf] %v1457
        %1842 = vst [vmem:[%s159 + $0x140] sm:$0xf] %v1458
        %1843 = vst [vmem:[%s159 + $0x144] sm:$0xf] %v1459
        %1844 = vst [vmem:[%s159 + $0x148] sm:$0xf] %v1460
        %1845 = vst [vmem:[%s159 + $0x14c] sm:$0xf] %v1461
        %1846 = vst [vmem:[%s159 + $0x150] sm:$0xf] %v1462
        %1847 = vst [vmem:[%s159 + $0x154] sm:$0xf] %v1463
        %1848 = vst [vmem:[%s159 + $0x158] sm:$0xf] %v1464
        %1849 = vst [vmem:[%s159 + $0x15c] sm:$0xf] %v1465
        %1850 = vst [vmem:[%s159 + $0x160] sm:$0xf] %v1466
        %1851 = vst [vmem:[%s159 + $0x164] sm:$0xf] %v1467
        %1852 = vst [vmem:[%s159 + $0x168] sm:$0xf] %v1468
        %1853 = vst [vmem:[%s159 + $0x16c] sm:$0xf] %v1469
        %1854 = vst [vmem:[%s159 + $0x170] sm:$0xf] %v1470
        %1855 = vst [vmem:[%s159 + $0x174] sm:$0xf] %v1471
        %1856 = vst [vmem:[%s159 + $0x178] sm:$0xf] %v1472
        %1857 = vst [vmem:[%s159 + $0x17c] sm:$0xf] %v1473
        %1858 = vst [vmem:[%s159 + $0x180] sm:$0xf] %v1474
        %1859 = vst [vmem:[%s159 + $0x184] sm:$0xf] %v1475
        %1860 = vst [vmem:[%s159 + $0x188] sm:$0xf] %v1476
        %1861 = vst [vmem:[%s159 + $0x18c] sm:$0xf] %v1477
        %1862 = vst [vmem:[%s159 + $0x190] sm:$0xf] %v1478
        %1863 = vst [vmem:[%s159 + $0x194] sm:$0xf] %v1479
        %1864 = vst [vmem:[%s159 + $0x198] sm:$0xf] %v1480
        %1865 = vst [vmem:[%s159 + $0x19c] sm:$0xf] %v1481
        %1866 = vst [vmem:[%s159 + $0x1a0] sm:$0xf] %v1482
        %1867 = vst [vmem:[%s159 + $0x1a4] sm:$0xf] %v1483
        %1868 = vst [vmem:[%s159 + $0x1a8] sm:$0xf] %v1484
        %1869 = vst [vmem:[%s159 + $0x1ac] sm:$0xf] %v1485
        %1870 = vst [vmem:[%s159 + $0x1b0] sm:$0xf] %v1486
        %1871 = vst [vmem:[%s159 + $0x1b4] sm:$0xf] %v1487
        %1872 = vst [vmem:[%s159 + $0x1b8] sm:$0xf] %v1488
        %1873 = vst [vmem:[%s159 + $0x1bc] sm:$0xf] %v1489
        %1874 = vst [vmem:[%s159 + $0x1c0] sm:$0xf] %v1490
        %1875 = vst [vmem:[%s159 + $0x1c4] sm:$0xf] %v1491
        %1876 = vst [vmem:[%s159 + $0x1c8] sm:$0xf] %v1492
        %1877 = vst [vmem:[%s159 + $0x1cc] sm:$0xf] %v1493
        %1878 = vst [vmem:[%s159 + $0x1d0] sm:$0xf] %v1494
        %1879 = vst [vmem:[%s159 + $0x1d4] sm:$0xf] %v1495
        %1880 = vst [vmem:[%s159 + $0x1d8] sm:$0xf] %v1496
        %1881 = vst [vmem:[%s159 + $0x1dc] sm:$0xf] %v1497
        %1882 = vst [vmem:[%s159 + $0x1e0] sm:$0xf] %v1498
        %1883 = vst [vmem:[%s159 + $0x1e4] sm:$0xf] %v1499
        %1884 = vst [vmem:[%s159 + $0x1e8] sm:$0xf] %v1500
        %1885 = vst [vmem:[%s159 + $0x1ec] sm:$0xf] %v1501
        %1886 = vst [vmem:[%s159 + $0x1f0] sm:$0xf] %v1502
        %1887 = vst [vmem:[%s159 + $0x1f4] sm:$0xf] %v1503
        %1888 = vst [vmem:[%s159 + $0x1f8] sm:$0xf] %v1504
        %1889 = vst [vmem:[%s159 + $0x1fc] sm:$0xf] %v1505
        %1890 = vst [vmem:[%s159 + $0x200] sm:$0xf] %v1506
        %1891 = vst [vmem:[%s159 + $0x204] sm:$0xf] %v1507
        %1892 = vst [vmem:[%s159 + $0x208] sm:$0xf] %v1508
        %1893 = vst [vmem:[%s159 + $0x20c] sm:$0xf] %v1509
        %1894 = vst [vmem:[%s159 + $0x210] sm:$0xf] %v1510
        %1895 = vst [vmem:[%s159 + $0x214] sm:$0xf] %v1511
        %1896 = vst [vmem:[%s159 + $0x218] sm:$0xf] %v1512
        %1897 = vst [vmem:[%s159 + $0x21c] sm:$0xf] %v1513
        %1898 = vst [vmem:[%s159 + $0x220] sm:$0xf] %v1514
        %1899 = vst [vmem:[%s159 + $0x224] sm:$0xf] %v1515
        %1900 = vst [vmem:[%s159 + $0x228] sm:$0xf] %v1516
        %1901 = vst [vmem:[%s159 + $0x22c] sm:$0xf] %v1517
        %1902 = vst [vmem:[%s159 + $0x230] sm:$0xf] %v1518
        %1903 = vst [vmem:[%s159 + $0x234] sm:$0xf] %v1519
        %1904 = vst [vmem:[%s159 + $0x238] sm:$0xf] %v1520
        %1905 = vst [vmem:[%s159 + $0x23c] sm:$0xf] %v1521
        %1906 = vst [vmem:[%s159 + $0x240] sm:$0xf] %v1522
        %1907 = vst [vmem:[%s159 + $0x244] sm:$0xf] %v1523
        %1908 = vst [vmem:[%s159 + $0x248] sm:$0xf] %v1524
        %1909 = vst [vmem:[%s159 + $0x24c] sm:$0xf] %v1525
        %1910 = vst [vmem:[%s159 + $0x250] sm:$0xf] %v1526
        %1911 = vst [vmem:[%s159 + $0x254] sm:$0xf] %v1527
        %1912 = vst [vmem:[%s159 + $0x258] sm:$0xf] %v1528
        %1913 = vst [vmem:[%s159 + $0x25c] sm:$0xf] %v1529
        %1914 = vst [vmem:[%s159 + $0x260] sm:$0xf] %v1530
        %1915 = vst [vmem:[%s159 + $0x264] sm:$0xf] %v1531
        %1916 = vst [vmem:[%s159 + $0x268] sm:$0xf] %v1532
        %1917 = vst [vmem:[%s159 + $0x26c] sm:$0xf] %v1533
        %1918 = vst [vmem:[%s159 + $0x270] sm:$0xf] %v1534
        %1919 = vst [vmem:[%s159 + $0x274] sm:$0xf] %v1535
        %1920 = vst [vmem:[%s159 + $0x278] sm:$0xf] %v1536
        %1921 = vst [vmem:[%s159 + $0x27c] sm:$0xf] %v1537
        %1922 = vst [vmem:[%s159 + $0x280] sm:$0xf] %v1538
        %1923 = vst [vmem:[%s159 + $0x284] sm:$0xf] %v1539
        %1924 = vst [vmem:[%s159 + $0x288] sm:$0xf] %v1540
        %1925 = vst [vmem:[%s159 + $0x28c] sm:$0xf] %v1541
        %1926 = vst [vmem:[%s159 + $0x290] sm:$0xf] %v1542
        %1927 = vst [vmem:[%s159 + $0x294] sm:$0xf] %v1543
        %1928 = vst [vmem:[%s159 + $0x298] sm:$0xf] %v1544
        %1929 = vst [vmem:[%s159 + $0x29c] sm:$0xf] %v1545
        %1930 = vst [vmem:[%s159 + $0x2a0] sm:$0xf] %v1546
        %1931 = vst [vmem:[%s159 + $0x2a4] sm:$0xf] %v1547
        %1932 = vst [vmem:[%s159 + $0x2a8] sm:$0xf] %v1548
        %1933 = vst [vmem:[%s159 + $0x2ac] sm:$0xf] %v1549
        %1934 = vst [vmem:[%s159 + $0x2b0] sm:$0xf] %v1550
        %1935 = vst [vmem:[%s159 + $0x2b4] sm:$0xf] %v1551
        %1936 = vst [vmem:[%s159 + $0x2b8] sm:$0xf] %v1552
        %1937 = vst [vmem:[%s159 + $0x2bc] sm:$0xf] %v1553
        %1938 = vst [vmem:[%s159 + $0x2c0] sm:$0xf] %v1554
        %1939 = vst [vmem:[%s159 + $0x2c4] sm:$0xf] %v1555
        %1940 = vst [vmem:[%s159 + $0x2c8] sm:$0xf] %v1556
        %1941 = vst [vmem:[%s159 + $0x2cc] sm:$0xf] %v1557
        %1942 = vst [vmem:[%s159 + $0x2d0] sm:$0xf] %v1558
        %1943 = vst [vmem:[%s159 + $0x2d4] sm:$0xf] %v1559
        %1944 = vst [vmem:[%s159 + $0x2d8] sm:$0xf] %v1560
        %1945 = vst [vmem:[%s159 + $0x2dc] sm:$0xf] %v1561
        %1946 = vst [vmem:[%s159 + $0x2e0] sm:$0xf] %v1562
        %1947 = vst [vmem:[%s159 + $0x2e4] sm:$0xf] %v1563
        %1948 = vst [vmem:[%s159 + $0x2e8] sm:$0xf] %v1564
        %1949 = vst [vmem:[%s159 + $0x2ec] sm:$0xf] %v1565
        %1950 = vst [vmem:[%s159 + $0x2f0] sm:$0xf] %v1566
        %1951 = vst [vmem:[%s159 + $0x2f4] sm:$0xf] %v1567
        %1952 = vst [vmem:[%s159 + $0x2f8] sm:$0xf] %v1568
        %1953 = vst [vmem:[%s159 + $0x2fc] sm:$0xf] %v1569
        %s1954 = sand.u32 %s52, 1
        %s1955 = scalar_lea.sflag [#allocation4], %s1954
        %s1956 = sand.u32 %s52, 1
        %s1957 = smul.addr %s1956, 768
        %s1958 = scalar_lea.vmem [#allocation5], %s1957
        // Predicated region
        $region29: #{tpu_custom_call.1} parent=23 // pred_check
          %p1959 = pneg %p62
        $region30: #{tpu_custom_call.1} parent=23 // pred_check_branch
          %1961 = sbr.rel (%p1959) target = $region32
        $region31: #{tpu_custom_call.1} parent=23 // pred_region
          #allocation9 [shape = 'u32[6]{0}', space=smem, size = 0x18, scoped, tag = 'DMA stride descriptor']
          %s1962 = smul.u32 64, %s18
          %s1964 = ssub.s32 12288, 12288
          %1965 = vsyncadd %s1955, %s1964
          %s1966 = smul.addr %s1962, 64
          %s1967 = scalar_lea.hbm %s1, %s1966
          %s1969 = sshll.u32 1, 14
          %s1970 = sxor.u32 4294967295, %s1969
          %s1973 = sshll.u32 7, 18
          %s1974 = sxor.u32 4294967295, %s1973
          %s1975 = sand.u32 0, %s1974
          %s1977 = sor.u32 %s1975, 0
          %s1979 = sshll.u32 3, 24
          %s1980 = sxor.u32 4294967295, %s1979
          %s1981 = sand.u32 %s1977, %s1980
          %s1983 = sor.u32 %s1981, 0
          %s1984 = sshll.u32 %s1958, 4
          %s1985 = int_to_ptr.vmem [resolvable:$true] %s1984
          %1991 = sst [smem:[#allocation9]] 4096
          %s1992 = scalar_lea.smem [#allocation9], 1
          %1993 = sst [smem:[%s1992]] 8192
          %s1994 = scalar_lea.smem [#allocation9], 2
          %1995 = sst [smem:[%s1994]] 64
          %s1996 = scalar_lea.smem [#allocation9], 3
          %1997 = sst [smem:[%s1996]] 64
          %s1998 = scalar_lea.smem [#allocation9], 4
          %1999 = sst [smem:[%s1998]] 64
          %s2000 = scalar_lea.smem [#allocation9], 5
          %2001 = sst [smem:[%s2000]] 4
          %2003 = dma.general %s1985, 12288, %s1967, %s1955, [#allocation8], [#allocation9], %s1983, 0
        $region32: #{tpu_custom_call.1} parent=23 // pred_fallthru
          _
      $region24: #{tpu_custom_call.1} parent=5 // pred_fallthru
        _
      %p2004 = scmp.le.s32.totalorder 2, %s13
      // Predicated region
      $region33: #{tpu_custom_call.1} parent=5 // pred_check
        %p2005 = pneg %p2004
      $region34: #{tpu_custom_call.1} parent=5 // pred_check_branch
        %2007 = sbr.rel (%p2005) target = $region36
      $region35: #{tpu_custom_call.1} parent=5 // pred_region
        %s2008 = ssub.s32 %s13, 2
        // Predicated region
        $region37: #{tpu_custom_call.1} parent=35 // pred_check
          %p2009 = pneg %p68
        $region38: #{tpu_custom_call.1} parent=35 // pred_check_branch
          %2011 = sbr.rel (%p2009) target = $region40
        $region39: #{tpu_custom_call.1} parent=35 // pred_region
          %s2012 = sand.u32 %s53, 1
          %s2013 = scalar_lea.sflag [#allocation4], %s2012
          %s2014 = sand.u32 %s53, 1
          %s2015 = smul.addr %s2014, 768
          %s2016 = scalar_lea.vmem [#allocation5], %s2015
          %2017 = dma.done %s2013, 12288
        $region40: #{tpu_custom_call.1} parent=35 // pred_fallthru
          _
      $region36: #{tpu_custom_call.1} parent=5 // pred_fallthru
        _
    $region6: #{tpu_custom_call.1} parent=1 // loop_footer
      %s17 = sadd.s32 1, %s13
    $region7: #{tpu_custom_call.1} parent=1 // loop_footer_branch
      %12 = sbr.rel target = $region3
    $region8: #{tpu_custom_call.1} parent=1 // loop_exit
      _
    %2018 = vsyncpa [#allocation3], 1
    %s2019 = scalar_lea.sflag [#allocation3], 1
    %2020 = vsyncpa %s2019, 1
    %2021 = vsyncpa [#allocation4], 1
    %s2022 = scalar_lea.sflag [#allocation4], 1
    %2023 = vsyncpa %s2022, 1

</llo_original>
